<compile_context>
chip_gen: v7x
topology: tpu7x:2x2x1
jax: 0.10.0
libtpu: 0.0.40
codegen_flags: <defaults>
</compile_context>

<pallas_src>
import functools

import jax
import jax.numpy as jnp
from jax.experimental import pallas as pl
from jax.experimental.pallas import tpu as pltpu


# Logical dims (representative EfficientNet-style extractor).
C_IN = 3
C_STEM = 32          # stem channels
C_BLOCK = 64         # MBConv-block output channels
IN_FEATURES = 128    # stands in for enet._fc.in_features (1280 for b0)
OUT_DIM = 5

# Lane-padded dims (keep lane dims multiples of 128, contraction dims 8-aligned).
CPAD = 128                   # every channel axis padded to one full lane register
K_STEM = 3 * 3 * C_IN        # 27
K_STEM_PAD = 32              # 8-aligned contraction dim for the stem matmul

# Explicit scoped-VMEM limit: safe on v5e/v6e/v7x; raise on v5e/v6e for bigger tiles.
_VMEM_LIMIT_BYTES = 32 * 1024 * 1024


def _cparams(dimension_semantics):
    return pltpu.CompilerParams(dimension_semantics=dimension_semantics,
                                vmem_limit_bytes=_VMEM_LIMIT_BYTES)


# ---------------------------------------------------------------------------
# Stem: im2col (wrapper) + M-tiled matmul+bias+swish kernel
# ---------------------------------------------------------------------------
def _matmul_bias_swish_kernel(x_ref, w_ref, b_ref, o_ref):
    """o = swish(x @ w + b) for one (tile_m, K) x (K, CPAD) tile. bf16 in, f32 acc."""
    y = jnp.dot(x_ref[...], w_ref[...], preferred_element_type=jnp.float32)
    y = y + b_ref[...]                       # (1, CPAD) broadcasts over (tile_m, CPAD)
    y = y * jax.nn.sigmoid(y)                # swish / SiLU
    o_ref[...] = y.astype(o_ref.dtype)


def _stem_patches(x_nhwc):
    """im2col for the 3x3/stride-2 stem (TF 'static same' padding).

    K is zero-padded 27 -> 32 (8-aligned) and patches are emitted in bf16, so
    for a stride-2 stem this intermediate is only ~1.1x the f32 input bytes
    (each pixel lands in ~2.25 patches), not a 9x blow-up.
    # TODO(synk): move the tap extraction fully inside the stem kernel
    # (halo-row blocks gathered in VMEM) to remove this HBM intermediate.
    """
    B, H, W, _ = x_nhwc.shape
    OH, OW = -(-H // 2), -(-W // 2)
    pad_h = max((OH - 1) * 2 + 3 - H, 0)
    pad_w = max((OW - 1) * 2 + 3 - W, 0)
    xp = jnp.pad(x_nhwc, ((0, 0), (pad_h // 2, pad_h - pad_h // 2),
                          (pad_w // 2, pad_w - pad_w // 2), (0, 0)))
    taps = [xp[:, i:i + 2 * OH:2, j:j + 2 * OW:2, :]
            for i in range(3) for j in range(3)]
    patches = jnp.concatenate(taps, axis=-1)                     # (B, OH, OW, 27)
    patches = jnp.pad(patches, ((0, 0), (0, 0), (0, 0), (0, K_STEM_PAD - K_STEM)))
    return patches.reshape(B * OH * OW, K_STEM_PAD).astype(jnp.bfloat16), (B, OH, OW)


def stem_conv(x_nhwc, w, b, *, tile_m):
    """3x3 stride-2 conv + bias + swish -> (B, OH, OW, CPAD) bf16."""
    patches, (B, OH, OW) = _stem_patches(x_nhwc)
    M = patches.shape[0]
    assert M % tile_m == 0, (M, tile_m)
    out = pl.pallas_call(
        _matmul_bias_swish_kernel,
        out_shape=jax.ShapeDtypeStruct((M, CPAD), jnp.bfloat16),
        grid=(M // tile_m,),
        in_specs=[
            pl.BlockSpec((tile_m, K_STEM_PAD), lambda i: (i, 0)),
            pl.BlockSpec((K_STEM_PAD, CPAD), lambda i: (0, 0)),   # resident weight
            pl.BlockSpec((1, CPAD), lambda i: (0, 0)),            # resident bias
        ],
        out_specs=pl.BlockSpec((tile_m, CPAD), lambda i: (i, 0)),
        compiler_params=_cparams(("parallel",)),
    )(patches, w, b)
    return out.reshape(B, OH, OW, CPAD)


# ---------------------------------------------------------------------------
# Fused: depthwise 3x3 + swish, pointwise 1x1 + swish, head 1x1 + swish,
#        global-average-pool, myfc Linear — single kernel, no intermediate HBM
# ---------------------------------------------------------------------------
def _dw_pw_head_pool_fc_kernel(x_ref, dw_w_ref, dw_b_ref, pw_w_ref, pw_b_ref,
                               hd_w_ref, hd_b_ref, fc_w_ref, fc_b_ref,
                               o_ref, acc_ref, *, tile_rows, ow, inv_hw):
    """Per (batch, output-row block):
       depthwise 3x3 (stride 1, pre-padded) + bias + swish   (VPU)
       pointwise 1x1 + swish, head 1x1 + swish               (MXU)
       accumulate the global-average pool in VMEM scratch; the myfc Linear
       runs in the last-row-block epilogue.

    x_ref:  (1, OH+2, OW+2, CPAD) bf16 resident padded stem image (this batch)
    dw_w_ref: (3, 3, CPAD) f32   dw_b_ref: (1, 1, CPAD) f32
    pw/hd/fc weights: (CPAD, CPAD) bf16   biases: (1, CPAD) f32
    o_ref: (1, 1, CPAD) f32      acc_ref: (1, CPAD) f32 scratch
    """
    r = pl.program_id(1)

    @pl.when(r == 0)
    def _init():
        acc_ref[...] = jnp.zeros_like(acc_ref)

    base = r * tile_rows

    # --- depthwise 3x3 + bias + swish (VPU, f32 accumulate) ---
    # TODO(synk): kw taps are sublane-misaligned slices; pltpu.roll along the
    #             sublane axis would move the shifts onto the idle XLU slot.
    acc = jnp.zeros((1, tile_rows, ow, CPAD), jnp.float32)
    for kh in range(3):
        for kw in range(3):
            patch = x_ref[:, pl.ds(base + kh, tile_rows), pl.ds(kw, ow), :]
            acc = acc + patch.astype(jnp.float32) * dw_w_ref[kh:kh + 1, kw:kw + 1, :]
    acc = acc + dw_b_ref[...]
    acc = acc * jax.nn.sigmoid(acc)
    # (1, tile_rows, ow, CPAD) -> (tile_rows*ow, CPAD): lane dim preserved,
    # ow is a multiple of 8 so the sublane merge is layout-free.
    dw_act = acc.reshape(tile_rows * ow, CPAD).astype(jnp.bfloat16)

    # --- pointwise 1x1 + swish, head 1x1 + swish (MXU, f32 accumulate) ---
    pw = jnp.dot(dw_act, pw_w_ref[...], preferred_element_type=jnp.float32)
    pw = pw + pw_b_ref[...]
    pw = pw * jax.nn.sigmoid(pw)
    hd = jnp.dot(pw.astype(jnp.bfloat16), hd_w_ref[...],
                 preferred_element_type=jnp.float32)
    hd = hd + hd_b_ref[...]
    hd = hd * jax.nn.sigmoid(hd)

    # --- global-average-pool accumulation ---
    acc_ref[...] = acc_ref[...] + jnp.sum(hd, axis=0, keepdims=True)

    # --- myfc Linear epilogue on the last row block of this batch item ---
    @pl.when(r == pl.num_programs(1) - 1)
    def _finalize():
        feats = acc_ref[...] * inv_hw                               # (1, CPAD) f32
        logits = jnp.dot(feats.astype(jnp.bfloat16), fc_w_ref[...],
                         preferred_element_type=jnp.float32)
        logits = logits + fc_b_ref[...]
        o_ref[...] = logits.reshape(1, 1, CPAD).astype(o_ref.dtype)


def dw_pw_head_pool_fc(stem_nhwc, params, *, tile_rows):
    B, OH, OW, C = stem_nhwc.shape
    assert C == CPAD and OH % tile_rows == 0, (stem_nhwc.shape, tile_rows)
    assert OW % 8 == 0, OW   # keeps the in-kernel (rows, OW, C)->(rows*OW, C) merge layout-free
    xp = jnp.pad(stem_nhwc, ((0, 0), (1, 1), (1, 1), (0, 0)))   # 'same' for k=3, s=1
    kern = functools.partial(_dw_pw_head_pool_fc_kernel,
                             tile_rows=tile_rows, ow=OW, inv_hw=1.0 / float(OH * OW))
    full2 = lambda b_, r_: (0, 0)
    full3 = lambda b_, r_: (0, 0, 0)
    out = pl.pallas_call(
        kern,
        out_shape=jax.ShapeDtypeStruct((B, 1, CPAD), jnp.float32),
        grid=(B, OH // tile_rows),
        in_specs=[
            # padded stem image: DMA'd once per batch item (index depends on b only)
            pl.BlockSpec((1, OH + 2, OW + 2, CPAD), lambda b_, r_: (b_, 0, 0, 0)),
            pl.BlockSpec((3, 3, CPAD), full3),   # dw_w   (resident)
            pl.BlockSpec((1, 1, CPAD), full3),   # dw_b
            pl.BlockSpec((CPAD, CPAD), full2),   # pw_w   (resident)
            pl.BlockSpec((1, CPAD), full2),      # pw_b
            pl.BlockSpec((CPAD, CPAD), full2),   # head_w (resident)
            pl.BlockSpec((1, CPAD), full2),      # head_b
            pl.BlockSpec((CPAD, CPAD), full2),   # fc_w   (resident)
            pl.BlockSpec((1, CPAD), full2),      # fc_b
        ],
        out_specs=pl.BlockSpec((1, 1, CPAD), lambda b_, r_: (b_, 0, 0)),
        scratch_shapes=[pltpu.VMEM((1, CPAD), jnp.float32)],
        compiler_params=_cparams(("parallel", "arbitrary")),
    )(xp, params["dw_w"], params["dw_b"], params["pw_w"], params["pw_b"],
      params["head_w"], params["head_b"], params["fc_w"], params["fc_b"])
    return out.reshape(B, CPAD)


# ---------------------------------------------------------------------------
# Parameters (deterministic synthetic weights, BN folded, lane-padded)
# ---------------------------------------------------------------------------
def _pad_to(a, shape):
    return jnp.pad(a, [(0, t - s) for s, t in zip(a.shape, shape)])


def init_params(key):
    """Zero-padded lane-dense weights.  Padded channels carry exact zeros
    through bias + swish, so numerics match the unpadded logical network.
    Note: im2col K ordering is (kh, kw, Cin) minor — a real checkpoint's
    (Cout, Cin, kh, kw) weights would need the matching permute + BN folding."""
    ks = jax.random.split(key, 10)
    s = 0.1
    stem_w = jax.random.normal(ks[0], (K_STEM, C_STEM), jnp.float32) * s
    stem_b = jax.random.normal(ks[1], (C_STEM,), jnp.float32) * s
    dw_w = jax.random.normal(ks[2], (3, 3, C_STEM), jnp.float32) * s
    dw_b = jax.random.normal(ks[3], (C_STEM,), jnp.float32) * s
    pw_w = jax.random.normal(ks[4], (C_STEM, C_BLOCK), jnp.float32) * s
    pw_b = jax.random.normal(ks[5], (C_BLOCK,), jnp.float32) * s
    head_w = jax.random.normal(ks[6], (C_BLOCK, IN_FEATURES), jnp.float32) * s
    head_b = jax.random.normal(ks[7], (IN_FEATURES,), jnp.float32) * s
    fc_w = jax.random.normal(ks[8], (IN_FEATURES, OUT_DIM), jnp.float32) * s
    fc_b = jax.random.normal(ks[9], (OUT_DIM,), jnp.float32) * s

    return {
        # MXU operands in bf16; biases and depthwise (VPU) weights stay f32.
        "stem_w": _pad_to(stem_w, (K_STEM_PAD, CPAD)).astype(jnp.bfloat16),
        "stem_b": _pad_to(stem_b.reshape(1, -1), (1, CPAD)),
        "dw_w": _pad_to(dw_w, (3, 3, CPAD)),
        "dw_b": _pad_to(dw_b.reshape(1, 1, -1), (1, 1, CPAD)),
        "pw_w": _pad_to(pw_w, (CPAD, CPAD)).astype(jnp.bfloat16),
        "pw_b": _pad_to(pw_b.reshape(1, -1), (1, CPAD)),
        "head_w": _pad_to(head_w, (CPAD, CPAD)).astype(jnp.bfloat16),
        "head_b": _pad_to(head_b.reshape(1, -1), (1, CPAD)),
        "fc_w": _pad_to(fc_w, (CPAD, CPAD)).astype(jnp.bfloat16),
        "fc_b": _pad_to(fc_b.reshape(1, -1), (1, CPAD)),
    }


# ---------------------------------------------------------------------------
# enetv2 forward
# ---------------------------------------------------------------------------
def enetv2_forward(params, x_nchw, *, stem_tile_m=64, tile_rows=4):
    """x_nchw: (B, 3, H, W) float32 -> (B, OUT_DIM) float32 logits.

    Tile sizes are per-generation knobs: on v5e/v6e (128 MiB VMEM) raise
    stem_tile_m towards 1024-2048 and tile_rows towards 16; on v7x (64 MiB)
    keep stem_tile_m <= 512 and tile_rows ~ 8.  They must divide B*OH*OW and
    OH respectively.
    """
    x = jnp.transpose(x_nchw, (0, 2, 3, 1))                  # NCHW -> NHWC

    # --- extract(): representative EfficientNet feature path (BN folded) ---
    stem = stem_conv(x, params["stem_w"], params["stem_b"], tile_m=stem_tile_m)
    # Fused depthwise + pointwise + head + global-average-pool + myfc Linear.
    logits_padded = dw_pw_head_pool_fc(stem, params, tile_rows=tile_rows)
    return logits_padded[:, :OUT_DIM]


if __name__ == "__main__":
    key = jax.random.PRNGKey(0)
    pkey, xkey = jax.random.split(key)
    params = init_params(pkey)

    # Small NCHW input consistent with the PyTorch module's image input.
    x = jax.random.normal(xkey, (2, 3, 16, 16), jnp.float32)

    fwd = jax.jit(functools.partial(enetv2_forward, stem_tile_m=64, tile_rows=4))
    out = jax.block_until_ready(fwd(params, x))
    assert out.shape == (2, OUT_DIM), out.shape
    assert bool(jnp.all(jnp.isfinite(out)))
    print("KERNEL_OK")
</pallas_src>

<mosaic_0001>
module attributes {stable_mosaic.version = 11 : i64} {
  func.func @_matmul_bias_swish_kernel(%arg0: i32, %arg1: memref<64x32xbf16, #tpu.memory_space<vmem>>, %arg2: memref<32x128xbf16, #tpu.memory_space<vmem>>, %arg3: memref<1x128xf32, #tpu.memory_space<vmem>>, %arg4: memref<64x128xbf16, #tpu.memory_space<vmem>>) attributes {dimension_semantics = [#tpu.dimension_semantics<parallel>], iteration_bounds = array<i64: 2>, scalar_prefetch = 0 : i64, scratch_operands = 0 : i64, tpu.core_type = #tpu.core_type<tc>, window_params = [{transform_indices = @transform_0, window_bounds = array<i64: 64, 32>}, {pipeline_mode = #tpu.pipeline_mode<synchronous>, transform_indices = @transform_1, window_bounds = array<i64: 32, 128>}, {pipeline_mode = #tpu.pipeline_mode<synchronous>, transform_indices = @transform_2, window_bounds = array<i64: 1, 128>}, {transform_indices = @transform_3, window_bounds = array<i64: 64, 128>}]} {
    %c0 = arith.constant 0 : index
    %c0_0 = arith.constant 0 : index
    %0 = vector.load %arg1[%c0, %c0_0] : memref<64x32xbf16, #tpu.memory_space<vmem>>, vector<64x32xbf16>
    %c0_1 = arith.constant 0 : index
    %c0_2 = arith.constant 0 : index
    %1 = vector.load %arg2[%c0_1, %c0_2] : memref<32x128xbf16, #tpu.memory_space<vmem>>, vector<32x128xbf16>
    %cst = arith.constant dense<0.000000e+00> : vector<64x128xf32>
    %2 = tpu.matmul %0, %1, %cst {dimension_numbers = #tpu.dot_dimension_numbers<[1], [0], [0], [1], [0, 0, 1, 1], [], []>} : vector<64x32xbf16>, vector<32x128xbf16>, vector<64x128xf32> -> vector<64x128xf32>
    %c0_3 = arith.constant 0 : index
    %c0_4 = arith.constant 0 : index
    %3 = vector.load %arg3[%c0_3, %c0_4] : memref<1x128xf32, #tpu.memory_space<vmem>>, vector<1x128xf32>
    %4 = vector.broadcast %3 : vector<1x128xf32> to vector<64x128xf32>
    %5 = arith.addf %2, %4 : vector<64x128xf32>
    %6 = arith.negf %5 : vector<64x128xf32>
    %7 = math.exp %6 : vector<64x128xf32>
    %cst_5 = arith.constant 1.000000e+00 : f32
    %8 = vector.broadcast %cst_5 : f32 to vector<64x128xf32>
    %9 = arith.addf %8, %7 : vector<64x128xf32>
    %10 = arith.divf %8, %9 : vector<64x128xf32>
    %11 = arith.mulf %5, %10 : vector<64x128xf32>
    %12 = arith.truncf %11 : vector<64x128xf32> to vector<64x128xbf16>
    %c0_6 = arith.constant 0 : index
    %c0_7 = arith.constant 0 : index
    %13 = vector.load %arg4[%c0_6, %c0_7] : memref<64x128xbf16, #tpu.memory_space<vmem>>, vector<64x128xbf16>
    tpu.vector_store %arg4[%c0_6, %c0_7], %12 {strides = array<i32>} : memref<64x128xbf16, #tpu.memory_space<vmem>>, vector<64x128xbf16>,
    return
  }
  func.func @transform_0(%arg0: i32) -> (i32, i32) {
    %c0_i32 = arith.constant 0 : i32
    %c0_i32_0 = arith.constant 0 : i32
    return %arg0, %c0_i32 : i32, i32
  }
  func.func @transform_1(%arg0: i32) -> (i32, i32) {
    %c0_i32 = arith.constant 0 : i32
    %c0_i32_0 = arith.constant 0 : i32
    %c0_i32_1 = arith.constant 0 : i32
    return %c0_i32, %c0_i32_0 : i32, i32
  }
  func.func @transform_2(%arg0: i32) -> (i32, i32) {
    %c0_i32 = arith.constant 0 : i32
    %c0_i32_0 = arith.constant 0 : i32
    %c0_i32_1 = arith.constant 0 : i32
    return %c0_i32, %c0_i32_0 : i32, i32
  }
  func.func @transform_3(%arg0: i32) -> (i32, i32) {
    %c0_i32 = arith.constant 0 : i32
    %c0_i32_0 = arith.constant 0 : i32
    return %arg0, %c0_i32 : i32, i32
  }
}

module attributes {stable_mosaic.version = 11 : i64} {
  func.func @_dw_pw_head_pool_fc_kernel(%arg0: i32, %arg1: i32, %arg2: memref<1x10x10x128xbf16, #tpu.memory_space<vmem>>, %arg3: memref<3x3x128xf32, #tpu.memory_space<vmem>>, %arg4: memref<1x1x128xf32, #tpu.memory_space<vmem>>, %arg5: memref<128x128xbf16, #tpu.memory_space<vmem>>, %arg6: memref<1x128xf32, #tpu.memory_space<vmem>>, %arg7: memref<128x128xbf16, #tpu.memory_space<vmem>>, %arg8: memref<1x128xf32, #tpu.memory_space<vmem>>, %arg9: memref<128x128xbf16, #tpu.memory_space<vmem>>, %arg10: memref<1x128xf32, #tpu.memory_space<vmem>>, %arg11: memref<1x1x128xf32, #tpu.memory_space<vmem>>, %arg12: memref<1x128xf32, #tpu.memory_space<vmem>>) attributes {dimension_semantics = [#tpu.dimension_semantics<parallel>, #tpu.dimension_semantics<arbitrary>], iteration_bounds = array<i64: 2, 2>, scalar_prefetch = 0 : i64, scratch_operands = 1 : i64, tpu.core_type = #tpu.core_type<tc>, window_params = [{transform_indices = @transform_0, window_bounds = array<i64: 1, 10, 10, 128>}, {pipeline_mode = #tpu.pipeline_mode<synchronous>, transform_indices = @transform_1, window_bounds = array<i64: 3, 3, 128>}, {pipeline_mode = #tpu.pipeline_mode<synchronous>, transform_indices = @transform_2, window_bounds = array<i64: 1, 1, 128>}, {pipeline_mode = #tpu.pipeline_mode<synchronous>, transform_indices = @transform_3, window_bounds = array<i64: 128, 128>}, {pipeline_mode = #tpu.pipeline_mode<synchronous>, transform_indices = @transform_4, window_bounds = array<i64: 1, 128>}, {pipeline_mode = #tpu.pipeline_mode<synchronous>, transform_indices = @transform_5, window_bounds = array<i64: 128, 128>}, {pipeline_mode = #tpu.pipeline_mode<synchronous>, transform_indices = @transform_6, window_bounds = array<i64: 1, 128>}, {pipeline_mode = #tpu.pipeline_mode<synchronous>, transform_indices = @transform_7, window_bounds = array<i64: 128, 128>}, {pipeline_mode = #tpu.pipeline_mode<synchronous>, transform_indices = @transform_8, window_bounds = array<i64: 1, 128>}, {transform_indices = @transform_9, window_bounds = array<i64: 1, 1, 128>}]} {
    %c0_i32 = arith.constant 0 : i32
    %0 = arith.cmpi eq, %arg1, %c0_i32 : i32
    %1 = arith.extui %0 : i1 to i32
    %c0_i32_0 = arith.constant 0 : i32
    %2 = arith.cmpi ne, %1, %c0_i32_0 : i32
    scf.if %2 {
      %cst_82 = arith.constant 0.000000e+00 : f32
      %129 = vector.broadcast %cst_82 : f32 to vector<1x128xf32>
      %c0_83 = arith.constant 0 : index
      %c0_84 = arith.constant 0 : index
      %130 = vector.load %arg12[%c0_83, %c0_84] : memref<1x128xf32, #tpu.memory_space<vmem>>, vector<1x128xf32>
      tpu.vector_store %arg12[%c0_83, %c0_84], %129 {strides = array<i32>} : memref<1x128xf32, #tpu.memory_space<vmem>>, vector<1x128xf32>,
    } else {
    }
    %c4_i32 = arith.constant 4 : i32
    %3 = arith.muli %arg1, %c4_i32 : i32
    %cst = arith.constant 0.000000e+00 : f32
    %4 = vector.broadcast %cst : f32 to vector<1x4x8x128xf32>
    %c0_i32_1 = arith.constant 0 : i32
    %5 = arith.addi %3, %c0_i32_1 : i32
    %c0 = arith.constant 0 : index
    %6 = arith.index_cast %5 : i32 to index
    %c0_2 = arith.constant 0 : index
    %c0_3 = arith.constant 0 : index
    %7 = vector.load %arg2[%c0, %6, %c0_2, %c0_3] : memref<1x10x10x128xbf16, #tpu.memory_space<vmem>>, vector<1x4x8x128xbf16>
    %8 = arith.extf %7 : vector<1x4x8x128xbf16> to vector<1x4x8x128xf32>
    %c0_4 = arith.constant 0 : index
    %c0_5 = arith.constant 0 : index
    %c0_6 = arith.constant 0 : index
    %9 = vector.load %arg3[%c0_4, %c0_5, %c0_6] : memref<3x3x128xf32, #tpu.memory_space<vmem>>, vector<1x1x128xf32>
    %10 = vector.shape_cast %9 : vector<1x1x128xf32> to vector<1x1x1x128xf32>
    %11 = vector.broadcast %10 : vector<1x1x1x128xf32> to vector<1x4x8x128xf32>
    %12 = arith.mulf %8, %11 : vector<1x4x8x128xf32>
    %13 = arith.addf %4, %12 : vector<1x4x8x128xf32>
    %c0_i32_7 = arith.constant 0 : i32
    %14 = arith.addi %3, %c0_i32_7 : i32
    %c0_8 = arith.constant 0 : index
    %15 = arith.index_cast %14 : i32 to index
    %c1 = arith.constant 1 : index
    %c0_9 = arith.constant 0 : index
    %16 = vector.load %arg2[%c0_8, %15, %c1, %c0_9] : memref<1x10x10x128xbf16, #tpu.memory_space<vmem>>, vector<1x4x8x128xbf16>
    %17 = arith.extf %16 : vector<1x4x8x128xbf16> to vector<1x4x8x128xf32>
    %c0_10 = arith.constant 0 : index
    %c1_11 = arith.constant 1 : index
    %c0_12 = arith.constant 0 : index
    %18 = vector.load %arg3[%c0_10, %c1_11, %c0_12] : memref<3x3x128xf32, #tpu.memory_space<vmem>>, vector<1x1x128xf32>
    %19 = vector.shape_cast %18 : vector<1x1x128xf32> to vector<1x1x1x128xf32>
    %20 = vector.broadcast %19 : vector<1x1x1x128xf32> to vector<1x4x8x128xf32>
    %21 = arith.mulf %17, %20 : vector<1x4x8x128xf32>
    %22 = arith.addf %13, %21 : vector<1x4x8x128xf32>
    %c0_i32_13 = arith.constant 0 : i32
    %23 = arith.addi %3, %c0_i32_13 : i32
    %c0_14 = arith.constant 0 : index
    %24 = arith.index_cast %23 : i32 to index
    %c2 = arith.constant 2 : index
    %c0_15 = arith.constant 0 : index
    %25 = vector.load %arg2[%c0_14, %24, %c2, %c0_15] : memref<1x10x10x128xbf16, #tpu.memory_space<vmem>>, vector<1x4x8x128xbf16>
    %26 = arith.extf %25 : vector<1x4x8x128xbf16> to vector<1x4x8x128xf32>
    %c0_16 = arith.constant 0 : index
    %c2_17 = arith.constant 2 : index
    %c0_18 = arith.constant 0 : index
    %27 = vector.load %arg3[%c0_16, %c2_17, %c0_18] : memref<3x3x128xf32, #tpu.memory_space<vmem>>, vector<1x1x128xf32>
    %28 = vector.shape_cast %27 : vector<1x1x128xf32> to vector<1x1x1x128xf32>
    %29 = vector.broadcast %28 : vector<1x1x1x128xf32> to vector<1x4x8x128xf32>
    %30 = arith.mulf %26, %29 : vector<1x4x8x128xf32>
    %31 = arith.addf %22, %30 : vector<1x4x8x128xf32>
    %c1_i32 = arith.constant 1 : i32
    %32 = arith.addi %3, %c1_i32 : i32
    %c0_19 = arith.constant 0 : index
    %33 = arith.index_cast %32 : i32 to index
    %c0_20 = arith.constant 0 : index
    %c0_21 = arith.constant 0 : index
    %34 = vector.load %arg2[%c0_19, %33, %c0_20, %c0_21] : memref<1x10x10x128xbf16, #tpu.memory_space<vmem>>, vector<1x4x8x128xbf16>
    %35 = arith.extf %34 : vector<1x4x8x128xbf16> to vector<1x4x8x128xf32>
    %c1_22 = arith.constant 1 : index
    %c0_23 = arith.constant 0 : index
    %c0_24 = arith.constant 0 : index
    %36 = vector.load %arg3[%c1_22, %c0_23, %c0_24] : memref<3x3x128xf32, #tpu.memory_space<vmem>>, vector<1x1x128xf32>
    %37 = vector.shape_cast %36 : vector<1x1x128xf32> to vector<1x1x1x128xf32>
    %38 = vector.broadcast %37 : vector<1x1x1x128xf32> to vector<1x4x8x128xf32>
    %39 = arith.mulf %35, %38 : vector<1x4x8x128xf32>
    %40 = arith.addf %31, %39 : vector<1x4x8x128xf32>
    %c1_i32_25 = arith.constant 1 : i32
    %41 = arith.addi %3, %c1_i32_25 : i32
    %c0_26 = arith.constant 0 : index
    %42 = arith.index_cast %41 : i32 to index
    %c1_27 = arith.constant 1 : index
    %c0_28 = arith.constant 0 : index
    %43 = vector.load %arg2[%c0_26, %42, %c1_27, %c0_28] : memref<1x10x10x128xbf16, #tpu.memory_space<vmem>>, vector<1x4x8x128xbf16>
    %44 = arith.extf %43 : vector<1x4x8x128xbf16> to vector<1x4x8x128xf32>
    %c1_29 = arith.constant 1 : index
    %c1_30 = arith.constant 1 : index
    %c0_31 = arith.constant 0 : index
    %45 = vector.load %arg3[%c1_29, %c1_30, %c0_31] : memref<3x3x128xf32, #tpu.memory_space<vmem>>, vector<1x1x128xf32>
    %46 = vector.shape_cast %45 : vector<1x1x128xf32> to vector<1x1x1x128xf32>
    %47 = vector.broadcast %46 : vector<1x1x1x128xf32> to vector<1x4x8x128xf32>
    %48 = arith.mulf %44, %47 : vector<1x4x8x128xf32>
    %49 = arith.addf %40, %48 : vector<1x4x8x128xf32>
    %c1_i32_32 = arith.constant 1 : i32
    %50 = arith.addi %3, %c1_i32_32 : i32
    %c0_33 = arith.constant 0 : index
    %51 = arith.index_cast %50 : i32 to index
    %c2_34 = arith.constant 2 : index
    %c0_35 = arith.constant 0 : index
    %52 = vector.load %arg2[%c0_33, %51, %c2_34, %c0_35] : memref<1x10x10x128xbf16, #tpu.memory_space<vmem>>, vector<1x4x8x128xbf16>
    %53 = arith.extf %52 : vector<1x4x8x128xbf16> to vector<1x4x8x128xf32>
    %c1_36 = arith.constant 1 : index
    %c2_37 = arith.constant 2 : index
    %c0_38 = arith.constant 0 : index
    %54 = vector.load %arg3[%c1_36, %c2_37, %c0_38] : memref<3x3x128xf32, #tpu.memory_space<vmem>>, vector<1x1x128xf32>
    %55 = vector.shape_cast %54 : vector<1x1x128xf32> to vector<1x1x1x128xf32>
    %56 = vector.broadcast %55 : vector<1x1x1x128xf32> to vector<1x4x8x128xf32>
    %57 = arith.mulf %53, %56 : vector<1x4x8x128xf32>
    %58 = arith.addf %49, %57 : vector<1x4x8x128xf32>
    %c2_i32 = arith.constant 2 : i32
    %59 = arith.addi %3, %c2_i32 : i32
    %c0_39 = arith.constant 0 : index
    %60 = arith.index_cast %59 : i32 to index
    %c0_40 = arith.constant 0 : index
    %c0_41 = arith.constant 0 : index
    %61 = vector.load %arg2[%c0_39, %60, %c0_40, %c0_41] : memref<1x10x10x128xbf16, #tpu.memory_space<vmem>>, vector<1x4x8x128xbf16>
    %62 = arith.extf %61 : vector<1x4x8x128xbf16> to vector<1x4x8x128xf32>
    %c2_42 = arith.constant 2 : index
    %c0_43 = arith.constant 0 : index
    %c0_44 = arith.constant 0 : index
    %63 = vector.load %arg3[%c2_42, %c0_43, %c0_44] : memref<3x3x128xf32, #tpu.memory_space<vmem>>, vector<1x1x128xf32>
    %64 = vector.shape_cast %63 : vector<1x1x128xf32> to vector<1x1x1x128xf32>
    %65 = vector.broadcast %64 : vector<1x1x1x128xf32> to vector<1x4x8x128xf32>
    %66 = arith.mulf %62, %65 : vector<1x4x8x128xf32>
    %67 = arith.addf %58, %66 : vector<1x4x8x128xf32>
    %c2_i32_45 = arith.constant 2 : i32
    %68 = arith.addi %3, %c2_i32_45 : i32
    %c0_46 = arith.constant 0 : index
    %69 = arith.index_cast %68 : i32 to index
    %c1_47 = arith.constant 1 : index
    %c0_48 = arith.constant 0 : index
    %70 = vector.load %arg2[%c0_46, %69, %c1_47, %c0_48] : memref<1x10x10x128xbf16, #tpu.memory_space<vmem>>, vector<1x4x8x128xbf16>
    %71 = arith.extf %70 : vector<1x4x8x128xbf16> to vector<1x4x8x128xf32>
    %c2_49 = arith.constant 2 : index
    %c1_50 = arith.constant 1 : index
    %c0_51 = arith.constant 0 : index
    %72 = vector.load %arg3[%c2_49, %c1_50, %c0_51] : memref<3x3x128xf32, #tpu.memory_space<vmem>>, vector<1x1x128xf32>
    %73 = vector.shape_cast %72 : vector<1x1x128xf32> to vector<1x1x1x128xf32>
    %74 = vector.broadcast %73 : vector<1x1x1x128xf32> to vector<1x4x8x128xf32>
    %75 = arith.mulf %71, %74 : vector<1x4x8x128xf32>
    %76 = arith.addf %67, %75 : vector<1x4x8x128xf32>
    %c2_i32_52 = arith.constant 2 : i32
    %77 = arith.addi %3, %c2_i32_52 : i32
    %c0_53 = arith.constant 0 : index
    %78 = arith.index_cast %77 : i32 to index
    %c2_54 = arith.constant 2 : index
    %c0_55 = arith.constant 0 : index
    %79 = vector.load %arg2[%c0_53, %78, %c2_54, %c0_55] : memref<1x10x10x128xbf16, #tpu.memory_space<vmem>>, vector<1x4x8x128xbf16>
    %80 = arith.extf %79 : vector<1x4x8x128xbf16> to vector<1x4x8x128xf32>
    %c2_56 = arith.constant 2 : index
    %c2_57 = arith.constant 2 : index
    %c0_58 = arith.constant 0 : index
    %81 = vector.load %arg3[%c2_56, %c2_57, %c0_58] : memref<3x3x128xf32, #tpu.memory_space<vmem>>, vector<1x1x128xf32>
    %82 = vector.shape_cast %81 : vector<1x1x128xf32> to vector<1x1x1x128xf32>
    %83 = vector.broadcast %82 : vector<1x1x1x128xf32> to vector<1x4x8x128xf32>
    %84 = arith.mulf %80, %83 : vector<1x4x8x128xf32>
    %85 = arith.addf %76, %84 : vector<1x4x8x128xf32>
    %c0_59 = arith.constant 0 : index
    %c0_60 = arith.constant 0 : index
    %c0_61 = arith.constant 0 : index
    %86 = vector.load %arg4[%c0_59, %c0_60, %c0_61] : memref<1x1x128xf32, #tpu.memory_space<vmem>>, vector<1x1x128xf32>
    %87 = vector.shape_cast %86 : vector<1x1x128xf32> to vector<1x1x1x128xf32>
    %88 = vector.broadcast %87 : vector<1x1x1x128xf32> to vector<1x4x8x128xf32>
    %89 = arith.addf %85, %88 : vector<1x4x8x128xf32>
    %90 = arith.negf %89 : vector<1x4x8x128xf32>
    %91 = math.exp %90 : vector<1x4x8x128xf32>
    %cst_62 = arith.constant 1.000000e+00 : f32
    %92 = vector.broadcast %cst_62 : f32 to vector<1x4x8x128xf32>
    %93 = arith.addf %92, %91 : vector<1x4x8x128xf32>
    %94 = arith.divf %92, %93 : vector<1x4x8x128xf32>
    %95 = arith.mulf %89, %94 : vector<1x4x8x128xf32>
    %96 = vector.shape_cast %95 : vector<1x4x8x128xf32> to vector<32x128xf32>
    %97 = arith.truncf %96 : vector<32x128xf32> to vector<32x128xbf16>
    %c0_63 = arith.constant 0 : index
    %c0_64 = arith.constant 0 : index
    %98 = vector.load %arg5[%c0_63, %c0_64] : memref<128x128xbf16, #tpu.memory_space<vmem>>, vector<128x128xbf16>
    %cst_65 = arith.constant dense<0.000000e+00> : vector<32x128xf32>
    %99 = tpu.matmul %97, %98, %cst_65 {dimension_numbers = #tpu.dot_dimension_numbers<[1], [0], [0], [1], [0, 0, 1, 1], [], []>} : vector<32x128xbf16>, vector<128x128xbf16>, vector<32x128xf32> -> vector<32x128xf32>
    %c0_66 = arith.constant 0 : index
    %c0_67 = arith.constant 0 : index
    %100 = vector.load %arg6[%c0_66, %c0_67] : memref<1x128xf32, #tpu.memory_space<vmem>>, vector<1x128xf32>
    %101 = vector.broadcast %100 : vector<1x128xf32> to vector<32x128xf32>
    %102 = arith.addf %99, %101 : vector<32x128xf32>
    %103 = arith.negf %102 : vector<32x128xf32>
    %104 = math.exp %103 : vector<32x128xf32>
    %cst_68 = arith.constant 1.000000e+00 : f32
    %105 = vector.broadcast %cst_68 : f32 to vector<32x128xf32>
    %106 = arith.addf %105, %104 : vector<32x128xf32>
    %107 = arith.divf %105, %106 : vector<32x128xf32>
    %108 = arith.mulf %102, %107 : vector<32x128xf32>
    %109 = arith.truncf %108 : vector<32x128xf32> to vector<32x128xbf16>
    %c0_69 = arith.constant 0 : index
    %c0_70 = arith.constant 0 : index
    %110 = vector.load %arg7[%c0_69, %c0_70] : memref<128x128xbf16, #tpu.memory_space<vmem>>, vector<128x128xbf16>
    %cst_71 = arith.constant dense<0.000000e+00> : vector<32x128xf32>
    %111 = tpu.matmul %109, %110, %cst_71 {dimension_numbers = #tpu.dot_dimension_numbers<[1], [0], [0], [1], [0, 0, 1, 1], [], []>} : vector<32x128xbf16>, vector<128x128xbf16>, vector<32x128xf32> -> vector<32x128xf32>
    %c0_72 = arith.constant 0 : index
    %c0_73 = arith.constant 0 : index
    %112 = vector.load %arg8[%c0_72, %c0_73] : memref<1x128xf32, #tpu.memory_space<vmem>>, vector<1x128xf32>
    %113 = vector.broadcast %112 : vector<1x128xf32> to vector<32x128xf32>
    %114 = arith.addf %111, %113 : vector<32x128xf32>
    %115 = arith.negf %114 : vector<32x128xf32>
    %116 = math.exp %115 : vector<32x128xf32>
    %cst_74 = arith.constant 1.000000e+00 : f32
    %117 = vector.broadcast %cst_74 : f32 to vector<32x128xf32>
    %118 = arith.addf %117, %116 : vector<32x128xf32>
    %119 = arith.divf %117, %118 : vector<32x128xf32>
    %120 = arith.mulf %114, %119 : vector<32x128xf32>
    %c0_75 = arith.constant 0 : index
    %c0_76 = arith.constant 0 : index
    %121 = vector.load %arg12[%c0_75, %c0_76] : memref<1x128xf32, #tpu.memory_space<vmem>>, vector<1x128xf32>
    %cst_77 = arith.constant dense<0.000000e+00> : vector<128xf32>
    %122 = vector.multi_reduction <add>, %120, %cst_77 [0] : vector<32x128xf32> to vector<128xf32>
    %123 = vector.shape_cast %122 : vector<128xf32> to vector<1x128xf32>
    %124 = arith.addf %121, %123 : vector<1x128xf32>
    %c0_78 = arith.constant 0 : index
    %c0_79 = arith.constant 0 : index
    %125 = vector.load %arg12[%c0_78, %c0_79] : memref<1x128xf32, #tpu.memory_space<vmem>>, vector<1x128xf32>
    tpu.vector_store %arg12[%c0_78, %c0_79], %124 {strides = array<i32>} : memref<1x128xf32, #tpu.memory_space<vmem>>, vector<1x128xf32>,
    %c1_i32_80 = arith.constant 1 : i32
    %126 = arith.cmpi eq, %arg1, %c1_i32_80 : i32
    %127 = arith.extui %126 : i1 to i32
    %c0_i32_81 = arith.constant 0 : i32
    %128 = arith.cmpi ne, %127, %c0_i32_81 : i32
    scf.if %128 {
      %c0_82 = arith.constant 0 : index
      %c0_83 = arith.constant 0 : index
      %129 = vector.load %arg12[%c0_82, %c0_83] : memref<1x128xf32, #tpu.memory_space<vmem>>, vector<1x128xf32>
      %cst_84 = arith.constant 1.562500e-02 : f32
      %130 = vector.broadcast %cst_84 : f32 to vector<1x128xf32>
      %131 = arith.mulf %129, %130 : vector<1x128xf32>
      %132 = arith.truncf %131 : vector<1x128xf32> to vector<1x128xbf16>
      %c0_85 = arith.constant 0 : index
      %c0_86 = arith.constant 0 : index
      %133 = vector.load %arg9[%c0_85, %c0_86] : memref<128x128xbf16, #tpu.memory_space<vmem>>, vector<128x128xbf16>
      %cst_87 = arith.constant dense<0.000000e+00> : vector<1x128xf32>
      %134 = tpu.matmul %132, %133, %cst_87 {dimension_numbers = #tpu.dot_dimension_numbers<[1], [0], [0], [1], [0, 0, 1, 1], [], []>} : vector<1x128xbf16>, vector<128x128xbf16>, vector<1x128xf32> -> vector<1x128xf32>
      %c0_88 = arith.constant 0 : index
      %c0_89 = arith.constant 0 : index
      %135 = vector.load %arg10[%c0_88, %c0_89] : memref<1x128xf32, #tpu.memory_space<vmem>>, vector<1x128xf32>
      %136 = arith.addf %134, %135 : vector<1x128xf32>
      %137 = vector.shape_cast %136 : vector<1x128xf32> to vector<1x1x128xf32>
      %c0_90 = arith.constant 0 : index
      %c0_91 = arith.constant 0 : index
      %c0_92 = arith.constant 0 : index
      %138 = vector.load %arg11[%c0_90, %c0_91, %c0_92] : memref<1x1x128xf32, #tpu.memory_space<vmem>>, vector<1x1x128xf32>
      tpu.vector_store %arg11[%c0_90, %c0_91, %c0_92], %137 {strides = array<i32>} : memref<1x1x128xf32, #tpu.memory_space<vmem>>, vector<1x1x128xf32>,
    } else {
    }
    return
  }
  func.func @transform_0(%arg0: i32, %arg1: i32) -> (i32, i32, i32, i32) {
    %c0_i32 = arith.constant 0 : i32
    %c0_i32_0 = arith.constant 0 : i32
    %c0_i32_1 = arith.constant 0 : i32
    %c0_i32_2 = arith.constant 0 : i32
    return %arg0, %c0_i32, %c0_i32_0, %c0_i32_1 : i32, i32, i32, i32
  }
  func.func @transform_1(%arg0: i32, %arg1: i32) -> (i32, i32, i32) {
    %c0_i32 = arith.constant 0 : i32
    %c0_i32_0 = arith.constant 0 : i32
    %c0_i32_1 = arith.constant 0 : i32
    %c0_i32_2 = arith.constant 0 : i32
    return %c0_i32, %c0_i32_0, %c0_i32_1 : i32, i32, i32
  }
  func.func @transform_2(%arg0: i32, %arg1: i32) -> (i32, i32, i32) {
    %c0_i32 = arith.constant 0 : i32
    %c0_i32_0 = arith.constant 0 : i32
    %c0_i32_1 = arith.constant 0 : i32
    %c0_i32_2 = arith.constant 0 : i32
    return %c0_i32, %c0_i32_0, %c0_i32_1 : i32, i32, i32
  }
  func.func @transform_3(%arg0: i32, %arg1: i32) -> (i32, i32) {
    %c0_i32 = arith.constant 0 : i32
    %c0_i32_0 = arith.constant 0 : i32
    %c0_i32_1 = arith.constant 0 : i32
    return %c0_i32, %c0_i32_0 : i32, i32
  }
  func.func @transform_4(%arg0: i32, %arg1: i32) -> (i32, i32) {
    %c0_i32 = arith.constant 0 : i32
    %c0_i32_0 = arith.constant 0 : i32
    %c0_i32_1 = arith.constant 0 : i32
    return %c0_i32, %c0_i32_0 : i32, i32
  }
  func.func @transform_5(%arg0: i32, %arg1: i32) -> (i32, i32) {
    %c0_i32 = arith.constant 0 : i32
    %c0_i32_0 = arith.constant 0 : i32
    %c0_i32_1 = arith.constant 0 : i32
    return %c0_i32, %c0_i32_0 : i32, i32
  }
  func.func @transform_6(%arg0: i32, %arg1: i32) -> (i32, i32) {
    %c0_i32 = arith.constant 0 : i32
    %c0_i32_0 = arith.constant 0 : i32
    %c0_i32_1 = arith.constant 0 : i32
    return %c0_i32, %c0_i32_0 : i32, i32
  }
  func.func @transform_7(%arg0: i32, %arg1: i32) -> (i32, i32) {
    %c0_i32 = arith.constant 0 : i32
    %c0_i32_0 = arith.constant 0 : i32
    %c0_i32_1 = arith.constant 0 : i32
    return %c0_i32, %c0_i32_0 : i32, i32
  }
  func.func @transform_8(%arg0: i32, %arg1: i32) -> (i32, i32) {
    %c0_i32 = arith.constant 0 : i32
    %c0_i32_0 = arith.constant 0 : i32
    %c0_i32_1 = arith.constant 0 : i32
    return %c0_i32, %c0_i32_0 : i32, i32
  }
  func.func @transform_9(%arg0: i32, %arg1: i32) -> (i32, i32, i32) {
    %c0_i32 = arith.constant 0 : i32
    %c0_i32_0 = arith.constant 0 : i32
    %c0_i32_1 = arith.constant 0 : i32
    return %arg0, %c0_i32, %c0_i32_0 : i32, i32, i32
  }
}

</mosaic_0001>

<llo_original>
// kernel: enetv2_forward.2
$region0: #{enetv2_forward.2}
  #allocation0 [shape = 'u32[]', space=smem, size = 0x4, offset = 0x4, fixed_abs, tag = 'smem constant byte address 0x4 - core index']
  #allocation1 [shape = 'u32[144,128]{1,0:T(1,128)}', space=vmem, size = 0x12000, scoped, tag = 'internal scratch']
  %s0 = inlined_call_operand.vmem [shape: bf16[128,32], index: 0, kind: input, shape index: {}]
  %s1 = inlined_call_operand.vmem [shape: bf16[32,128], index: 1, kind: input, shape index: {}]
  %s2 = inlined_call_operand.vmem [shape: f32[1,128], index: 2, kind: input, shape index: {}]
  %s3 = inlined_call_operand.vmem [shape: bf16[128,128], index: 3, kind: output, shape index: {}]
  %s4 = sld [smem:[#allocation0]]
  $region45: #{enetv2_forward.2} parent=0
    _
  %s6 = ssub.s32 1, %s4
  %s7 = scalar_select 0, %s6, %s4
  loop: start=0, step=1, limit=4
  $region2: #{enetv2_forward.2} parent=0 // loop_pre_header
    _
  $region3: #{enetv2_forward.2} parent=0 // loop_header
    %s9 = sphi 0, %s13
    %p10 = scmp.ge.s32.totalorder %s9, 4
    %s19 = sphi 0, %s21
    %s22 = sphi 0, %s19
    %s23 = sphi 0, %s22
    %s39 = sphi 0, %s23
    %s43 = sphi 0, %s43
    %s45 = sphi 0, %s43
    %s46 = sphi 0, %s45
    %s60 = sphi 0, %s46
    %s64 = sphi 0, %s64
    %s66 = sphi 0, %s64
    %s67 = sphi 0, %s66
    %s81 = sphi 0, %s67
    %s87 = sphi 0, %s89
    %s90 = sphi 0, %s87
    %s91 = sphi 0, %s90
    %s107 = sphi 0, %s91
  $region4: #{enetv2_forward.2} parent=0 // loop_header_branch
    %12 = sbr.rel (%p10) target = $region8
  $region5: #{enetv2_forward.2} parent=0 // loop_body
    %s14 = ssub.s32 %s9, 1
    %s15 = ssub.s32 %s9, 2
    %s16 = sadd.s32 %s9, 1
    %s17 = ssub.s32 %s9, %s16
    %p18 = scmp.eq.s32.totalorder %s17, 0
    %s20 = sadd.s32 %s19, 1
    %s21 = scalar_select %p18, %s19, %s20
    %p24 = pneg %p18
    %p25 = scmp.eq.s32.totalorder %s9, 1
    %p26 = por %p24, %p25
    %p27 = scmp.ne.s32.totalorder %s19, %s22
    %p28 = scmp.eq.s32.totalorder %s9, 0
    %p29 = por %p27, %p28
    %p30 = scmp.ne.s32.totalorder %s19, %s22
    %p31 = scmp.eq.s32.totalorder %s14, 1
    %p32 = por %p30, %p31
    %p33 = scmp.ne.s32.totalorder %s22, %s23
    %p34 = scmp.eq.s32.totalorder %s14, 0
    %p35 = por %p33, %p34
    %p36 = scmp.ne.s32.totalorder %s22, %s23
    %p37 = scmp.eq.s32.totalorder %s15, 1
    %p38 = por %p36, %p37
    %p40 = scmp.ne.s32.totalorder %s23, %s39
    %p41 = scmp.eq.s32.totalorder %s15, 0
    %p42 = por %p40, %p41
    %s44 = sadd.s32 %s43, 1
    %p47 = scmp.eq.s32.totalorder %s9, 1
    %p48 = scmp.ne.s32.totalorder %s43, %s45
    %p49 = scmp.eq.s32.totalorder %s9, 0
    %p50 = por %p48, %p49
    %p51 = scmp.ne.s32.totalorder %s43, %s45
    %p52 = scmp.eq.s32.totalorder %s14, 1
    %p53 = por %p51, %p52
    %p54 = scmp.ne.s32.totalorder %s45, %s46
    %p55 = scmp.eq.s32.totalorder %s14, 0
    %p56 = por %p54, %p55
    %p57 = scmp.ne.s32.totalorder %s45, %s46
    %p58 = scmp.eq.s32.totalorder %s15, 1
    %p59 = por %p57, %p58
    %p61 = scmp.ne.s32.totalorder %s46, %s60
    %p62 = scmp.eq.s32.totalorder %s15, 0
    %p63 = por %p61, %p62
    %s65 = sadd.s32 %s64, 1
    %p68 = scmp.eq.s32.totalorder %s9, 1
    %p69 = scmp.ne.s32.totalorder %s64, %s66
    %p70 = scmp.eq.s32.totalorder %s9, 0
    %p71 = por %p69, %p70
    %p72 = scmp.ne.s32.totalorder %s64, %s66
    %p73 = scmp.eq.s32.totalorder %s14, 1
    %p74 = por %p72, %p73
    %p75 = scmp.ne.s32.totalorder %s66, %s67
    %p76 = scmp.eq.s32.totalorder %s14, 0
    %p77 = por %p75, %p76
    %p78 = scmp.ne.s32.totalorder %s66, %s67
    %p79 = scmp.eq.s32.totalorder %s15, 1
    %p80 = por %p78, %p79
    %p82 = scmp.ne.s32.totalorder %s67, %s81
    %p83 = scmp.eq.s32.totalorder %s15, 0
    %p84 = por %p82, %p83
    %s85 = ssub.s32 %s9, %s16
    %p86 = scmp.eq.s32.totalorder %s85, 0
    %s88 = sadd.s32 %s87, 1
    %s89 = scalar_select %p86, %s87, %s88
    %p92 = pneg %p86
    %p93 = scmp.eq.s32.totalorder %s9, 1
    %p94 = por %p92, %p93
    %p95 = scmp.ne.s32.totalorder %s87, %s90
    %p96 = scmp.eq.s32.totalorder %s9, 0
    %p97 = por %p95, %p96
    %p98 = scmp.ne.s32.totalorder %s87, %s90
    %p99 = scmp.eq.s32.totalorder %s14, 1
    %p100 = por %p98, %p99
    %p101 = scmp.ne.s32.totalorder %s90, %s91
    %p102 = scmp.eq.s32.totalorder %s14, 0
    %p103 = por %p101, %p102
    %p104 = scmp.ne.s32.totalorder %s90, %s91
    %p105 = scmp.eq.s32.totalorder %s15, 1
    %p106 = por %p104, %p105
    %p108 = scmp.ne.s32.totalorder %s91, %s107
    %p109 = scmp.eq.s32.totalorder %s15, 0
    %p110 = por %p108, %p109
    %p111 = scmp.le.s32.totalorder 1, %s9
    %p112 = scmp.lt.s32.totalorder %s9, 3
    %p113 = pnand %p111, %p112
    %p114 = pneg %p113
    // Predicated region
    $region9: #{enetv2_forward.2} parent=5 // pred_check
      _
    $region10: #{enetv2_forward.2} parent=5 // pred_check_branch
      %116 = sbr.rel (%p113) target = $region12
    $region11: #{enetv2_forward.2} parent=5 // pred_region
      %s117 = ssub.s32 %s9, 1
      // Predicated region
      $region13: #{enetv2_forward.2} parent=11 // pred_check
        %p118 = pneg %p56
      $region14: #{enetv2_forward.2} parent=11 // pred_check_branch
        %120 = sbr.rel (%p118) target = $region16
      $region15: #{enetv2_forward.2} parent=11 // pred_region
        _
      $region16: #{enetv2_forward.2} parent=11 // pred_fallthru
        _
      // Predicated region
      $region17: #{enetv2_forward.2} parent=11 // pred_check
        %p121 = pneg %p77
      $region18: #{enetv2_forward.2} parent=11 // pred_check_branch
        %123 = sbr.rel (%p121) target = $region20
      $region19: #{enetv2_forward.2} parent=11 // pred_region
        _
      $region20: #{enetv2_forward.2} parent=11 // pred_fallthru
        _
    $region12: #{enetv2_forward.2} parent=5 // pred_fallthru
      _
    %p124 = scmp.lt.s32.totalorder %s9, 2
    // Predicated region
    $region21: #{enetv2_forward.2} parent=5 // pred_check
      %p125 = pneg %p124
    $region22: #{enetv2_forward.2} parent=5 // pred_check_branch
      %127 = sbr.rel (%p125) target = $region24
    $region23: #{enetv2_forward.2} parent=5 // pred_region
      // Predicated region
      $region25: #{enetv2_forward.2} parent=23 // pred_check
        %p128 = pneg %p29
      $region26: #{enetv2_forward.2} parent=23 // pred_check_branch
        %130 = sbr.rel (%p128) target = $region28
      $region27: #{enetv2_forward.2} parent=23 // pred_region
        %s131 = smul.u32 8, %s9
        %p132 = scmp.lt.s32.totalorder %s131, 15
        %s133 = scalar_select %p132, %s131, 15
        %s134 = smul.addr %s133, 4
        %s135 = scalar_lea.vmem %s0, %s134
        %s136 = smul.u32 8, %s9
      $region28: #{enetv2_forward.2} parent=23 // pred_fallthru
        _
    $region24: #{enetv2_forward.2} parent=5 // pred_fallthru
      _
    %p137 = scmp.le.s32.totalorder 1, %s9
    %p138 = scmp.lt.s32.totalorder %s9, 3
    %p139 = pnand %p137, %p138
    %p140 = pneg %p139
    // Predicated region
    $region29: #{enetv2_forward.2} parent=5 // pred_check
      _
    $region30: #{enetv2_forward.2} parent=5 // pred_check_branch
      %142 = sbr.rel (%p139) target = $region32
    $region31: #{enetv2_forward.2} parent=5 // pred_region
      %s143 = ssub.s32 %s9, 1
      %s144 = smul.u32 8, %s14
      %p145 = scmp.lt.s32.totalorder %s144, 15
      %s146 = scalar_select %p145, %s144, 15
      %s147 = smul.addr %s146, 4
      %s148 = scalar_lea.vmem %s0, %s147
      %p149 = pneg %p35
      %p150 = pneg %p32
      %p151 = pneg %p56
      %p152 = pneg %p53
      %p153 = pneg %p77
      %p154 = pneg %p74
      %p155 = pneg %p103
      %p156 = pneg %p100
      %s157 = smul.u32 8, %s14
      %p158 = scmp.lt.s32.totalorder %s157, 15
      %s159 = scalar_select %p158, %s157, 15
      %s160 = smul.addr %s159, 4
      %s161 = scalar_lea.vmem %s3, %s160
      %s162 = smul.u32 8, %s14
      %p163 = scmp.lt.s32.totalorder %s162, 15
      %s164 = scalar_select %p163, %s162, 15
      %s165 = smul.addr %s164, 4
      %s166 = scalar_lea.vmem %s0, %s165
      %s167 = smul.u32 8, %s14
      %s168 = smul.u32 8, %s14
      %p169 = scmp.lt.s32.totalorder %s168, 15
      %s170 = scalar_select %p169, %s168, 15
      %s171 = smul.addr %s170, 4
      %s172 = scalar_lea.vmem %s3, %s171
      %s173 = smul.u32 8, %s14
      %v175 = vld [vmem:[%s166] sm:$0xf]
      %v176 = vld [vmem:[%s166 + $0x4] sm:$0xf]
      %v177 = vld [vmem:[%s166 + $0x8] sm:$0xf]
      %v178 = vld [vmem:[%s166 + $0xc] sm:$0xf]
      %v179 = vld [vmem:[%s166 + $0x10] sm:$0xf]
      %v180 = vld [vmem:[%s166 + $0x14] sm:$0xf]
      %v181 = vld [vmem:[%s166 + $0x18] sm:$0xf]
      %v182 = vld [vmem:[%s166 + $0x1c] sm:$0xf]
      %v183 = vld [vmem:[%s1] sm:$0xf]
      %v184 = vld [vmem:[%s1 + $0x4] sm:$0xf]
      %v185 = vld [vmem:[%s1 + $0x8] sm:$0xf]
      %v186 = vld [vmem:[%s1 + $0xc] sm:$0xf]
      %v187 = vld [vmem:[%s2] sm:$0x1]
      %v189 = vlaneseq
      %v190 = vshrl.u32 %v189, 7
      %v191 = vsub.s32 0, %v190
      %v192 = vrot.slane %v187, %v191
      %v202 = vunpack.c.l.b16 %v175
      %v203 = vunpack.c.l.b16 %v176
      %v204 = vunpack.c.l.b16 %v177
      %v205 = vunpack.c.l.b16 %v178
      %v206 = vunpack.c.l.b16 %v179
      %v207 = vunpack.c.l.b16 %v180
      %v208 = vunpack.c.l.b16 %v181
      %v209 = vunpack.c.l.b16 %v182
      %v210 = vpack.c.b16 %v203, %v202
      %v211 = vpack.c.b16 %v205, %v204
      %v212 = vpack.c.b16 %v207, %v206
      %v213 = vpack.c.b16 %v209, %v208
      %v218 = vunpack.c.l.b16 %v183
      %v219 = vunpack.c.l.b16 %v184
      %v220 = vunpack.c.l.b16 %v185
      %v221 = vunpack.c.l.b16 %v186
      %v222 = vpack.c.b16 %v219, %v218
      %v223 = vpack.c.b16 %v221, %v220
      %vm226 = vcmask 261120
      %v228 = vsel %vm226, %v210, 0
      %v231 = vsel %vm226, %v211, 0
      %v234 = vsel %vm226, %v212, 0
      %v237 = vsel %vm226, %v213, 0
      %239 = vmatprep.subr.bf16.mxu0 0
      %240 = vmatpush1.bf16.msra.mxu0 %v222
      %241 = vmatprep.subr.bf16.mxu0 0
      %242 = vmatpush1.bf16.msra.mxu0 %v223
      %243 = vmatprep.subr.bf16.mxu0 0
      %244 = vmatpush1.bf16.msra.mxu0 0
      %245 = vmatprep.subr.bf16.mxu0 0
      %246 = vmatpush1.bf16.msra.mxu0 0
      %247 = vmatprep.subr.bf16.mxu0 0
      %248 = vmatpush1.bf16.msra.mxu0 0
      %249 = vmatprep.subr.bf16.mxu0 0
      %250 = vmatpush1.bf16.msra.mxu0 0
      %251 = vmatprep.subr.bf16.mxu0 0
      %252 = vmatpush1.bf16.msra.mxu0 0
      %253 = vmatprep.subr.bf16.mxu0 0
      %254 = vmatpush1.bf16.msra.mxu0 0
      %255 = vmatprep.subr.bf16.mxu0 0
      %256 = vmatpush1.bf16.msra.mxu0 0
      %257 = vmatprep.subr.bf16.mxu0 0
      %258 = vmatpush1.bf16.msra.mxu0 0
      %259 = vmatprep.subr.bf16.mxu0 0
      %260 = vmatpush1.bf16.msra.mxu0 0
      %261 = vmatprep.subr.bf16.mxu0 0
      %262 = vmatpush1.bf16.msra.mxu0 0
      %263 = vmatprep.subr.bf16.mxu0 0
      %264 = vmatpush1.bf16.msra.mxu0 0
      %265 = vmatprep.subr.bf16.mxu0 0
      %266 = vmatpush1.bf16.msra.mxu0 0
      %267 = vmatprep.subr.bf16.mxu0 0
      %268 = vmatpush1.bf16.msra.mxu0 0
      %269 = vmatprep.subr.bf16.mxu0 0
      %270 = vmatpush1.bf16.msra.mxu0 0
      %271 = vmatprep.mubr.bf16.mxu0 0
      %272 = vmatmul.mubr.bf16.gmra.mrb[0].mxu0 %v228
      %v273 = vpop.f32.mrb[0].mxu0
      %v274 = vadd.f32 %v192, %v273
      %v275 = vpop.f32.mrb[0].mxu0
      %v276 = vpop.f32.mrb[0].mxu0
      %v277 = vadd.f32 %v192, %v276
      %v278 = vpop.f32.mrb[0].mxu0
      %279 = vmatprep.mubr.bf16.mxu0 0
      %280 = vmatmul.mubr.bf16.gmra.mrb[0].mxu0 %v231
      %v281 = vpop.f32.mrb[0].mxu0
      %v282 = vadd.f32 %v192, %v281
      %v283 = vpop.f32.mrb[0].mxu0
      %v284 = vpop.f32.mrb[0].mxu0
      %v285 = vadd.f32 %v192, %v284
      %v286 = vpop.f32.mrb[0].mxu0
      %287 = vmatprep.mubr.bf16.mxu0 0
      %288 = vmatmul.mubr.bf16.gmra.mrb[0].mxu0 %v234
      %v289 = vpop.f32.mrb[0].mxu0
      %v290 = vadd.f32 %v192, %v289
      %v291 = vpop.f32.mrb[0].mxu0
      %v292 = vpop.f32.mrb[0].mxu0
      %v293 = vadd.f32 %v192, %v292
      %v294 = vpop.f32.mrb[0].mxu0
      %295 = vmatprep.mubr.bf16.mxu0 0
      %296 = vmatmul.mubr.bf16.gmra.mrb[0].mxu0 %v237
      %v297 = vpop.f32.mrb[0].mxu0
      %v298 = vadd.f32 %v192, %v297
      %v299 = vpop.f32.mrb[0].mxu0
      %v300 = vpop.f32.mrb[0].mxu0
      %v301 = vadd.f32 %v192, %v300
      %v302 = vpop.f32.mrb[0].mxu0
      %303 = vdwg.mxu0
      %v304 = vxor.u32 %v274, 2147483648
      %v305 = vxor.u32 %v277, 2147483648
      %v306 = vxor.u32 %v282, 2147483648
      %v307 = vxor.u32 %v285, 2147483648
      %v308 = vxor.u32 %v290, 2147483648
      %v309 = vxor.u32 %v293, 2147483648
      %v310 = vxor.u32 %v298, 2147483648
      %v311 = vxor.u32 %v301, 2147483648
      %v312 = vmul.f32 %v304, 1.442695
      %v313 = vpow.pop %v312
      %v314 = vmul.f32 %v305, 1.442695
      %v315 = vpow.pop %v314
      %v316 = vmul.f32 %v306, 1.442695
      %v317 = vpow.pop %v316
      %v318 = vmul.f32 %v307, 1.442695
      %v319 = vpow.pop %v318
      %v320 = vmul.f32 %v308, 1.442695
      %v321 = vpow.pop %v320
      %v322 = vmul.f32 %v309, 1.442695
      %v323 = vpow.pop %v322
      %v324 = vmul.f32 %v310, 1.442695
      %v325 = vpow.pop %v324
      %v326 = vmul.f32 %v311, 1.442695
      %v327 = vpow.pop %v326
      %v328 = vadd.f32 %v313, 1.0
      %v329 = vadd.f32 %v315, 1.0
      %v330 = vadd.f32 %v317, 1.0
      %v331 = vadd.f32 %v319, 1.0
      %v332 = vadd.f32 %v321, 1.0
      %v333 = vadd.f32 %v323, 1.0
      %v334 = vadd.f32 %v325, 1.0
      %v335 = vadd.f32 %v327, 1.0
      %v336 = vrcp.pop %v328
      %v337 = vmul.f32 1.0, %v336
      %v338 = vrcp.pop %v329
      %v339 = vmul.f32 1.0, %v338
      %v340 = vrcp.pop %v330
      %v341 = vmul.f32 1.0, %v340
      %v342 = vrcp.pop %v331
      %v343 = vmul.f32 1.0, %v342
      %v344 = vrcp.pop %v332
      %v345 = vmul.f32 1.0, %v344
      %v346 = vrcp.pop %v333
      %v347 = vmul.f32 1.0, %v346
      %v348 = vrcp.pop %v334
      %v349 = vmul.f32 1.0, %v348
      %v350 = vrcp.pop %v335
      %v351 = vmul.f32 1.0, %v350
      %v352 = vmul.f32 %v274, %v337
      %v353 = vmul.f32 %v277, %v339
      %v354 = vmul.f32 %v282, %v341
      %v355 = vmul.f32 %v285, %v343
      %v356 = vmul.f32 %v290, %v345
      %v357 = vmul.f32 %v293, %v347
      %v358 = vmul.f32 %v298, %v349
      %v359 = vmul.f32 %v301, %v351
      %v360 = vpack.c.bf16 %v353, %v352
      %v361 = vpack.c.bf16 %v355, %v354
      %v362 = vpack.c.bf16 %v357, %v356
      %v363 = vpack.c.bf16 %v359, %v358
      %v368 = vunpack.c.l.b16 %v360
      %v369 = vunpack.c.h.b16 %v360
      %v370 = vunpack.c.l.b16 %v361
      %v371 = vunpack.c.h.b16 %v361
      %v372 = vunpack.c.l.b16 %v362
      %v373 = vunpack.c.h.b16 %v362
      %v374 = vunpack.c.l.b16 %v363
      %v375 = vunpack.c.h.b16 %v363
      %v376 = vpack.c.b16 %v368, %v368
      %v377 = vpack.c.b16 %v369, %v369
      %v378 = vpack.c.b16 %v370, %v370
      %v379 = vpack.c.b16 %v371, %v371
      %v380 = vpack.c.b16 %v372, %v372
      %v381 = vpack.c.b16 %v373, %v373
      %v382 = vpack.c.b16 %v374, %v374
      %v383 = vpack.c.b16 %v375, %v375
      %392 = vst [vmem:[%s172] sm:$0xf] %v376
      %393 = vst [vmem:[%s172 + $0x4] sm:$0xf] %v377
      %394 = vst [vmem:[%s172 + $0x8] sm:$0xf] %v378
      %395 = vst [vmem:[%s172 + $0xc] sm:$0xf] %v379
      %396 = vst [vmem:[%s172 + $0x10] sm:$0xf] %v380
      %397 = vst [vmem:[%s172 + $0x14] sm:$0xf] %v381
      %398 = vst [vmem:[%s172 + $0x18] sm:$0xf] %v382
      %399 = vst [vmem:[%s172 + $0x1c] sm:$0xf] %v383
      %s400 = smul.u32 8, %s14
      %p401 = scmp.lt.s32.totalorder %s400, 15
      %s402 = scalar_select %p401, %s400, 15
      %s403 = smul.addr %s402, 4
      %s404 = scalar_lea.vmem %s3, %s403
      // Predicated region
      $region33: #{enetv2_forward.2} parent=31 // pred_check
        %p405 = pneg %p100
      $region34: #{enetv2_forward.2} parent=31 // pred_check_branch
        %407 = sbr.rel (%p405) target = $region36
      $region35: #{enetv2_forward.2} parent=31 // pred_region
        %s408 = smul.u32 8, %s14
      $region36: #{enetv2_forward.2} parent=31 // pred_fallthru
        _
    $region32: #{enetv2_forward.2} parent=5 // pred_fallthru
      _
    %p409 = scmp.le.s32.totalorder 2, %s9
    // Predicated region
    $region37: #{enetv2_forward.2} parent=5 // pred_check
      %p410 = pneg %p409
    $region38: #{enetv2_forward.2} parent=5 // pred_check_branch
      %412 = sbr.rel (%p410) target = $region40
    $region39: #{enetv2_forward.2} parent=5 // pred_region
      %s413 = ssub.s32 %s9, 2
      // Predicated region
      $region41: #{enetv2_forward.2} parent=39 // pred_check
        %p414 = pneg %p106
      $region42: #{enetv2_forward.2} parent=39 // pred_check_branch
        %416 = sbr.rel (%p414) target = $region44
      $region43: #{enetv2_forward.2} parent=39 // pred_region
        %s417 = smul.u32 8, %s15
        %p418 = scmp.lt.s32.totalorder %s417, 15
        %s419 = scalar_select %p418, %s417, 15
        %s420 = smul.addr %s419, 4
        %s421 = scalar_lea.vmem %s3, %s420
      $region44: #{enetv2_forward.2} parent=39 // pred_fallthru
        _
    $region40: #{enetv2_forward.2} parent=5 // pred_fallthru
      _
  $region6: #{enetv2_forward.2} parent=0 // loop_footer
    %s13 = sadd.s32 1, %s9
  $region7: #{enetv2_forward.2} parent=0 // loop_footer_branch
    %8 = sbr.rel target = $region3
  $region8: #{enetv2_forward.2} parent=0 // loop_exit
    _

// kernel: enetv2_forward.3
$region0: #{enetv2_forward.3}
  #allocation0 [shape = 'u32[]', space=smem, size = 0x4, offset = 0x4, fixed_abs, tag = 'smem constant byte address 0x4 - core index']
  #allocation1 [shape = 'u32[144,128]{1,0:T(1,128)}', space=vmem, size = 0x12000, scoped, tag = 'internal scratch']
  #allocation2 [shape = 'f32[1,128]{1,0:T(1,128)}', space=vmem, size = 0x200, scoped, tag = 'scratch operand']
  %s0 = inlined_call_operand.vmem [shape: bf16[2,10,10,128], index: 0, kind: input, shape index: {}]
  %s1 = inlined_call_operand.vmem [shape: f32[3,3,128], index: 1, kind: input, shape index: {}]
  %s2 = inlined_call_operand.vmem [shape: f32[1,1,128], index: 2, kind: input, shape index: {}]
  %s3 = inlined_call_operand.vmem [shape: bf16[128,128], index: 3, kind: input, shape index: {}]
  %s4 = inlined_call_operand.vmem [shape: f32[1,128], index: 4, kind: input, shape index: {}]
  %s5 = inlined_call_operand.vmem [shape: bf16[128,128], index: 5, kind: input, shape index: {}]
  %s6 = inlined_call_operand.vmem [shape: f32[1,128], index: 6, kind: input, shape index: {}]
  %s7 = inlined_call_operand.vmem [shape: bf16[128,128], index: 7, kind: input, shape index: {}]
  %s8 = inlined_call_operand.vmem [shape: f32[1,128], index: 8, kind: input, shape index: {}]
  %s9 = inlined_call_operand.hbm [shape: f32[2,1,128], index: 9, kind: output, shape index: {}]
  %s10 = sld [smem:[#allocation0]]
  $region77: #{enetv2_forward.3} parent=0
    _
  %s12 = ssub.s32 1, %s10
  %s13 = scalar_select 0, %s12, %s10
  $region1: #{enetv2_forward.3} parent=0
    #allocation3 [shape = 'u8[1024]{0}', space=vmem, size = 0x400, scoped, tag = 'output window, operand 0']
    #allocation4 [shape = 's32[2]{0}', space=sflag, size = 0x8, scoped, tag = 'scoped memory for enetv2_forward.3']
    %14 = vsyncpa [#allocation4], 0
    %s15 = scalar_lea.sflag [#allocation4], 1
    %16 = vsyncpa %s15, 0
    loop: start=0, step=1, limit=6
    $region2: #{enetv2_forward.3} parent=1 // loop_pre_header
      _
    $region3: #{enetv2_forward.3} parent=1 // loop_header
      %s18 = sphi 0, %s22
      %p19 = scmp.ge.s32.totalorder %s18, 6
      %s25 = sphi 0, %s37
      %s26 = sphi 0, %s33
      %s27 = sphi 0, %s25
      %s28 = sphi 0, %s26
      %s29 = sphi 0, %s27
      %s30 = sphi 0, %s28
      %s40 = sphi 0, %s42
      %s43 = sphi 0, %s40
      %s44 = sphi 0, %s43
      %s60 = sphi 0, %s44
      %s64 = sphi 0, %s64
      %s66 = sphi 0, %s64
      %s67 = sphi 0, %s66
      %s81 = sphi 0, %s67
      %s85 = sphi 0, %s85
      %s87 = sphi 0, %s85
      %s88 = sphi 0, %s87
      %s102 = sphi 0, %s88
      %s106 = sphi 0, %s106
      %s108 = sphi 0, %s106
      %s109 = sphi 0, %s108
      %s123 = sphi 0, %s109
      %s127 = sphi 0, %s127
      %s129 = sphi 0, %s127
      %s130 = sphi 0, %s129
      %s144 = sphi 0, %s130
      %s148 = sphi 0, %s148
      %s150 = sphi 0, %s148
      %s151 = sphi 0, %s150
      %s165 = sphi 0, %s151
      %s169 = sphi 0, %s169
      %s171 = sphi 0, %s169
      %s172 = sphi 0, %s171
      %s186 = sphi 0, %s172
      %s190 = sphi 0, %s190
      %s192 = sphi 0, %s190
      %s193 = sphi 0, %s192
      %s207 = sphi 0, %s193
      %s211 = sphi 0, %s211
      %s213 = sphi 0, %s211
      %s214 = sphi 0, %s213
      %s228 = sphi 0, %s214
      %s234 = sphi 0, %s236
      %s237 = sphi 0, %s234
      %s238 = sphi 0, %s237
      %s254 = sphi 0, %s238
    $region4: #{enetv2_forward.3} parent=1 // loop_header_branch
      %21 = sbr.rel (%p19) target = $region8
    $region5: #{enetv2_forward.3} parent=1 // loop_body
      %s23 = ssub.s32 %s18, 1
      %s24 = ssub.s32 %s18, 2
      %s31 = sadd.s32 1, %s26
      %p32 = scmp.ge.s32.totalorder %s31, 2
      %s33 = scalar_select %p32, 0, %s31
      %s34 = sadd.s32 1, %s25
      %s35 = scalar_select %p32, %s34, %s25
      %p36 = scmp.ge.s32.totalorder %s35, 2
      %s37 = scalar_select %p36, 0, %s35
      %s38 = ssub.s32 %s25, %s37
      %p39 = scmp.eq.s32.totalorder %s38, 0
      %s41 = sadd.s32 %s40, 1
      %s42 = scalar_select %p39, %s40, %s41
      %p45 = pneg %p39
      %p46 = scmp.eq.s32.totalorder %s18, 3
      %p47 = por %p45, %p46
      %p48 = scmp.ne.s32.totalorder %s40, %s43
      %p49 = scmp.eq.s32.totalorder %s18, 0
      %p50 = por %p48, %p49
      %p51 = scmp.ne.s32.totalorder %s40, %s43
      %p52 = scmp.eq.s32.totalorder %s23, 3
      %p53 = por %p51, %p52
      %p54 = scmp.ne.s32.totalorder %s43, %s44
      %p55 = scmp.eq.s32.totalorder %s23, 0
      %p56 = por %p54, %p55
      %p57 = scmp.ne.s32.totalorder %s43, %s44
      %p58 = scmp.eq.s32.totalorder %s24, 3
      %p59 = por %p57, %p58
      %p61 = scmp.ne.s32.totalorder %s44, %s60
      %p62 = scmp.eq.s32.totalorder %s24, 0
      %p63 = por %p61, %p62
      %s65 = sadd.s32 %s64, 1
      %p68 = scmp.eq.s32.totalorder %s18, 3
      %p69 = scmp.ne.s32.totalorder %s64, %s66
      %p70 = scmp.eq.s32.totalorder %s18, 0
      %p71 = por %p69, %p70
      %p72 = scmp.ne.s32.totalorder %s64, %s66
      %p73 = scmp.eq.s32.totalorder %s23, 3
      %p74 = por %p72, %p73
      %p75 = scmp.ne.s32.totalorder %s66, %s67
      %p76 = scmp.eq.s32.totalorder %s23, 0
      %p77 = por %p75, %p76
      %p78 = scmp.ne.s32.totalorder %s66, %s67
      %p79 = scmp.eq.s32.totalorder %s24, 3
      %p80 = por %p78, %p79
      %p82 = scmp.ne.s32.totalorder %s67, %s81
      %p83 = scmp.eq.s32.totalorder %s24, 0
      %p84 = por %p82, %p83
      %s86 = sadd.s32 %s85, 1
      %p89 = scmp.eq.s32.totalorder %s18, 3
      %p90 = scmp.ne.s32.totalorder %s85, %s87
      %p91 = scmp.eq.s32.totalorder %s18, 0
      %p92 = por %p90, %p91
      %p93 = scmp.ne.s32.totalorder %s85, %s87
      %p94 = scmp.eq.s32.totalorder %s23, 3
      %p95 = por %p93, %p94
      %p96 = scmp.ne.s32.totalorder %s87, %s88
      %p97 = scmp.eq.s32.totalorder %s23, 0
      %p98 = por %p96, %p97
      %p99 = scmp.ne.s32.totalorder %s87, %s88
      %p100 = scmp.eq.s32.totalorder %s24, 3
      %p101 = por %p99, %p100
      %p103 = scmp.ne.s32.totalorder %s88, %s102
      %p104 = scmp.eq.s32.totalorder %s24, 0
      %p105 = por %p103, %p104
      %s107 = sadd.s32 %s106, 1
      %p110 = scmp.eq.s32.totalorder %s18, 3
      %p111 = scmp.ne.s32.totalorder %s106, %s108
      %p112 = scmp.eq.s32.totalorder %s18, 0
      %p113 = por %p111, %p112
      %p114 = scmp.ne.s32.totalorder %s106, %s108
      %p115 = scmp.eq.s32.totalorder %s23, 3
      %p116 = por %p114, %p115
      %p117 = scmp.ne.s32.totalorder %s108, %s109
      %p118 = scmp.eq.s32.totalorder %s23, 0
      %p119 = por %p117, %p118
      %p120 = scmp.ne.s32.totalorder %s108, %s109
      %p121 = scmp.eq.s32.totalorder %s24, 3
      %p122 = por %p120, %p121
      %p124 = scmp.ne.s32.totalorder %s109, %s123
      %p125 = scmp.eq.s32.totalorder %s24, 0
      %p126 = por %p124, %p125
      %s128 = sadd.s32 %s127, 1
      %p131 = scmp.eq.s32.totalorder %s18, 3
      %p132 = scmp.ne.s32.totalorder %s127, %s129
      %p133 = scmp.eq.s32.totalorder %s18, 0
      %p134 = por %p132, %p133
      %p135 = scmp.ne.s32.totalorder %s127, %s129
      %p136 = scmp.eq.s32.totalorder %s23, 3
      %p137 = por %p135, %p136
      %p138 = scmp.ne.s32.totalorder %s129, %s130
      %p139 = scmp.eq.s32.totalorder %s23, 0
      %p140 = por %p138, %p139
      %p141 = scmp.ne.s32.totalorder %s129, %s130
      %p142 = scmp.eq.s32.totalorder %s24, 3
      %p143 = por %p141, %p142
      %p145 = scmp.ne.s32.totalorder %s130, %s144
      %p146 = scmp.eq.s32.totalorder %s24, 0
      %p147 = por %p145, %p146
      %s149 = sadd.s32 %s148, 1
      %p152 = scmp.eq.s32.totalorder %s18, 3
      %p153 = scmp.ne.s32.totalorder %s148, %s150
      %p154 = scmp.eq.s32.totalorder %s18, 0
      %p155 = por %p153, %p154
      %p156 = scmp.ne.s32.totalorder %s148, %s150
      %p157 = scmp.eq.s32.totalorder %s23, 3
      %p158 = por %p156, %p157
      %p159 = scmp.ne.s32.totalorder %s150, %s151
      %p160 = scmp.eq.s32.totalorder %s23, 0
      %p161 = por %p159, %p160
      %p162 = scmp.ne.s32.totalorder %s150, %s151
      %p163 = scmp.eq.s32.totalorder %s24, 3
      %p164 = por %p162, %p163
      %p166 = scmp.ne.s32.totalorder %s151, %s165
      %p167 = scmp.eq.s32.totalorder %s24, 0
      %p168 = por %p166, %p167
      %s170 = sadd.s32 %s169, 1
      %p173 = scmp.eq.s32.totalorder %s18, 3
      %p174 = scmp.ne.s32.totalorder %s169, %s171
      %p175 = scmp.eq.s32.totalorder %s18, 0
      %p176 = por %p174, %p175
      %p177 = scmp.ne.s32.totalorder %s169, %s171
      %p178 = scmp.eq.s32.totalorder %s23, 3
      %p179 = por %p177, %p178
      %p180 = scmp.ne.s32.totalorder %s171, %s172
      %p181 = scmp.eq.s32.totalorder %s23, 0
      %p182 = por %p180, %p181
      %p183 = scmp.ne.s32.totalorder %s171, %s172
      %p184 = scmp.eq.s32.totalorder %s24, 3
      %p185 = por %p183, %p184
      %p187 = scmp.ne.s32.totalorder %s172, %s186
      %p188 = scmp.eq.s32.totalorder %s24, 0
      %p189 = por %p187, %p188
      %s191 = sadd.s32 %s190, 1
      %p194 = scmp.eq.s32.totalorder %s18, 3
      %p195 = scmp.ne.s32.totalorder %s190, %s192
      %p196 = scmp.eq.s32.totalorder %s18, 0
      %p197 = por %p195, %p196
      %p198 = scmp.ne.s32.totalorder %s190, %s192
      %p199 = scmp.eq.s32.totalorder %s23, 3
      %p200 = por %p198, %p199
      %p201 = scmp.ne.s32.totalorder %s192, %s193
      %p202 = scmp.eq.s32.totalorder %s23, 0
      %p203 = por %p201, %p202
      %p204 = scmp.ne.s32.totalorder %s192, %s193
      %p205 = scmp.eq.s32.totalorder %s24, 3
      %p206 = por %p204, %p205
      %p208 = scmp.ne.s32.totalorder %s193, %s207
      %p209 = scmp.eq.s32.totalorder %s24, 0
      %p210 = por %p208, %p209
      %s212 = sadd.s32 %s211, 1
      %p215 = scmp.eq.s32.totalorder %s18, 3
      %p216 = scmp.ne.s32.totalorder %s211, %s213
      %p217 = scmp.eq.s32.totalorder %s18, 0
      %p218 = por %p216, %p217
      %p219 = scmp.ne.s32.totalorder %s211, %s213
      %p220 = scmp.eq.s32.totalorder %s23, 3
      %p221 = por %p219, %p220
      %p222 = scmp.ne.s32.totalorder %s213, %s214
      %p223 = scmp.eq.s32.totalorder %s23, 0
      %p224 = por %p222, %p223
      %p225 = scmp.ne.s32.totalorder %s213, %s214
      %p226 = scmp.eq.s32.totalorder %s24, 3
      %p227 = por %p225, %p226
      %p229 = scmp.ne.s32.totalorder %s214, %s228
      %p230 = scmp.eq.s32.totalorder %s24, 0
      %p231 = por %p229, %p230
      %s232 = ssub.s32 %s25, %s37
      %p233 = scmp.eq.s32.totalorder %s232, 0
      %s235 = sadd.s32 %s234, 1
      %s236 = scalar_select %p233, %s234, %s235
      %p239 = pneg %p233
      %p240 = scmp.eq.s32.totalorder %s18, 3
      %p241 = por %p239, %p240
      %p242 = scmp.ne.s32.totalorder %s234, %s237
      %p243 = scmp.eq.s32.totalorder %s18, 0
      %p244 = por %p242, %p243
      %p245 = scmp.ne.s32.totalorder %s234, %s237
      %p246 = scmp.eq.s32.totalorder %s23, 3
      %p247 = por %p245, %p246
      %p248 = scmp.ne.s32.totalorder %s237, %s238
      %p249 = scmp.eq.s32.totalorder %s23, 0
      %p250 = por %p248, %p249
      %p251 = scmp.ne.s32.totalorder %s237, %s238
      %p252 = scmp.eq.s32.totalorder %s24, 3
      %p253 = por %p251, %p252
      %p255 = scmp.ne.s32.totalorder %s238, %s254
      %p256 = scmp.eq.s32.totalorder %s24, 0
      %p257 = por %p255, %p256
      %p258 = scmp.le.s32.totalorder 1, %s18
      %p259 = scmp.lt.s32.totalorder %s18, 5
      %p260 = pnand %p258, %p259
      %p261 = pneg %p260
      // Predicated region
      $region9: #{enetv2_forward.3} parent=5 // pred_check
        _
      $region10: #{enetv2_forward.3} parent=5 // pred_check_branch
        %263 = sbr.rel (%p260) target = $region12
      $region11: #{enetv2_forward.3} parent=5 // pred_region
        %s264 = ssub.s32 %s18, 1
        // Predicated region
        $region13: #{enetv2_forward.3} parent=11 // pred_check
          %p265 = pneg %p77
        $region14: #{enetv2_forward.3} parent=11 // pred_check_branch
          %267 = sbr.rel (%p265) target = $region16
        $region15: #{enetv2_forward.3} parent=11 // pred_region
          _
        $region16: #{enetv2_forward.3} parent=11 // pred_fallthru
          _
        // Predicated region
        $region17: #{enetv2_forward.3} parent=11 // pred_check
          %p268 = pneg %p98
        $region18: #{enetv2_forward.3} parent=11 // pred_check_branch
          %270 = sbr.rel (%p268) target = $region20
        $region19: #{enetv2_forward.3} parent=11 // pred_region
          _
        $region20: #{enetv2_forward.3} parent=11 // pred_fallthru
          _
        // Predicated region
        $region21: #{enetv2_forward.3} parent=11 // pred_check
          %p271 = pneg %p119
        $region22: #{enetv2_forward.3} parent=11 // pred_check_branch
          %273 = sbr.rel (%p271) target = $region24
        $region23: #{enetv2_forward.3} parent=11 // pred_region
          _
        $region24: #{enetv2_forward.3} parent=11 // pred_fallthru
          _
        // Predicated region
        $region25: #{enetv2_forward.3} parent=11 // pred_check
          %p274 = pneg %p140
        $region26: #{enetv2_forward.3} parent=11 // pred_check_branch
          %276 = sbr.rel (%p274) target = $region28
        $region27: #{enetv2_forward.3} parent=11 // pred_region
          _
        $region28: #{enetv2_forward.3} parent=11 // pred_fallthru
          _
        // Predicated region
        $region29: #{enetv2_forward.3} parent=11 // pred_check
          %p277 = pneg %p161
        $region30: #{enetv2_forward.3} parent=11 // pred_check_branch
          %279 = sbr.rel (%p277) target = $region32
        $region31: #{enetv2_forward.3} parent=11 // pred_region
          _
        $region32: #{enetv2_forward.3} parent=11 // pred_fallthru
          _
        // Predicated region
        $region33: #{enetv2_forward.3} parent=11 // pred_check
          %p280 = pneg %p182
        $region34: #{enetv2_forward.3} parent=11 // pred_check_branch
          %282 = sbr.rel (%p280) target = $region36
        $region35: #{enetv2_forward.3} parent=11 // pred_region
          _
        $region36: #{enetv2_forward.3} parent=11 // pred_fallthru
          _
        // Predicated region
        $region37: #{enetv2_forward.3} parent=11 // pred_check
          %p283 = pneg %p203
        $region38: #{enetv2_forward.3} parent=11 // pred_check_branch
          %285 = sbr.rel (%p283) target = $region40
        $region39: #{enetv2_forward.3} parent=11 // pred_region
          _
        $region40: #{enetv2_forward.3} parent=11 // pred_fallthru
          _
        // Predicated region
        $region41: #{enetv2_forward.3} parent=11 // pred_check
          %p286 = pneg %p224
        $region42: #{enetv2_forward.3} parent=11 // pred_check_branch
          %288 = sbr.rel (%p286) target = $region44
        $region43: #{enetv2_forward.3} parent=11 // pred_region
          _
        $region44: #{enetv2_forward.3} parent=11 // pred_fallthru
          _
      $region12: #{enetv2_forward.3} parent=5 // pred_fallthru
        _
      %p289 = scmp.lt.s32.totalorder %s18, 4
      // Predicated region
      $region45: #{enetv2_forward.3} parent=5 // pred_check
        %p290 = pneg %p289
      $region46: #{enetv2_forward.3} parent=5 // pred_check_branch
        %292 = sbr.rel (%p290) target = $region48
      $region47: #{enetv2_forward.3} parent=5 // pred_region
        // Predicated region
        $region49: #{enetv2_forward.3} parent=47 // pred_check
          %p293 = pneg %p50
        $region50: #{enetv2_forward.3} parent=47 // pred_check_branch
          %295 = sbr.rel (%p293) target = $region52
        $region51: #{enetv2_forward.3} parent=47 // pred_region
          %p296 = scmp.lt.s32.totalorder %s25, 1
          %s297 = scalar_select %p296, %s25, 1
          %s298 = smul.addr %s297, 20
          %s299 = smul.addr %s298, 4
          %s300 = scalar_lea.vmem %s0, %s299
        $region52: #{enetv2_forward.3} parent=47 // pred_fallthru
          _
      $region48: #{enetv2_forward.3} parent=5 // pred_fallthru
        _
      %p301 = scmp.le.s32.totalorder 1, %s18
      %p302 = scmp.lt.s32.totalorder %s18, 5
      %p303 = pnand %p301, %p302
      %p304 = pneg %p303
      // Predicated region
      $region53: #{enetv2_forward.3} parent=5 // pred_check
        _
      $region54: #{enetv2_forward.3} parent=5 // pred_check_branch
        %306 = sbr.rel (%p303) target = $region56
      $region55: #{enetv2_forward.3} parent=5 // pred_region
        %s307 = ssub.s32 %s18, 1
        %p308 = scmp.lt.s32.totalorder %s27, 1
        %s309 = scalar_select %p308, %s27, 1
        %s310 = smul.addr %s309, 20
        %s311 = smul.addr %s310, 4
        %s312 = scalar_lea.vmem %s0, %s311
        %p313 = pneg %p56
        %p314 = pneg %p53
        %p315 = pneg %p77
        %p316 = pneg %p74
        %p317 = pneg %p98
        %p318 = pneg %p95
        %p319 = pneg %p119
        %p320 = pneg %p116
        %p321 = pneg %p140
        %p322 = pneg %p137
        %p323 = pneg %p161
        %p324 = pneg %p158
        %p325 = pneg %p182
        %p326 = pneg %p179
        %p327 = pneg %p203
        %p328 = pneg %p200
        %p329 = pneg %p224
        %p330 = pneg %p221
        %p331 = pneg %p250
        %p332 = pneg %p247
        %s333 = sand.u32 %s237, 1
        %s334 = scalar_lea.sflag [#allocation4], %s333
        %s335 = sand.u32 %s237, 1
        %s336 = scalar_lea.vmem [#allocation3], %s335
        %p337 = scmp.lt.s32.totalorder %s27, 1
        %s338 = scalar_select %p337, %s27, 1
        %s339 = smul.addr %s338, 20
        %s340 = smul.addr %s339, 4
        %s341 = scalar_lea.vmem %s0, %s340
        %p343 = scmp.eq.s32.totalorder %s28, 0
        // Predicated region
        $region57: #{enetv2_forward.3} parent=55 // pred_check
          %p344 = pneg %p343
        $region58: #{enetv2_forward.3} parent=55 // pred_check_branch
          %346 = sbr.rel (%p344) target = $region60
        $region59: #{enetv2_forward.3} parent=55 // pred_region
          %347 = vst [vmem:[#allocation2] sm:$0x1] 0.0
        $region60: #{enetv2_forward.3} parent=55 // pred_fallthru
          _
        %s348 = smul.u32 %s28, 4
        %s349 = smul.u32 %s348, 2
        %s350 = smul.addr %s349, 4
        %s351 = scalar_lea.vmem %s341, %s350
        %v352 = vld [vmem:[%s351] sm:$0xf]
        %v353 = vld [vmem:[%s351 + $0x8] sm:$0xf]
        %v354 = vld [vmem:[%s351 + $0x10] sm:$0xf]
        %v355 = vld [vmem:[%s351 + $0x18] sm:$0xf]
        %v356 = vunpack.c.l.bf16 %v352
        %v357 = vunpack.c.l.bf16 %v353
        %v358 = vunpack.c.l.bf16 %v354
        %v359 = vunpack.c.l.bf16 %v355
        %v360 = vld [vmem:[%s1] sm:$0x1]
        %v361 = vlaneseq
        %v362 = vshrl.u32 %v361, 7
        %v363 = vsub.s32 0, %v362
        %v364 = vrot.slane %v360, %v363
        %v365 = vmul.f32 %v356, %v364
        %v366 = vmul.f32 %v357, %v364
        %v367 = vmul.f32 %v358, %v364
        %v368 = vmul.f32 %v359, %v364
        %v369 = vadd.f32 %v365, 0.0
        %v370 = vadd.f32 %v366, 0.0
        %v371 = vadd.f32 %v367, 0.0
        %v372 = vadd.f32 %v368, 0.0
        %v373 = vld [vmem:[%s351 + $0x4] sm:$0x1]
        %v374 = vld [vmem:[%s351 + $0xc] sm:$0x1]
        %v375 = vld [vmem:[%s351 + $0x14] sm:$0x1]
        %v376 = vld [vmem:[%s351 + $0x1c] sm:$0x1]
        %v377 = vunpack.c.l.bf16 %v373
        %v378 = vunpack.c.l.bf16 %v374
        %v379 = vunpack.c.l.bf16 %v375
        %v380 = vunpack.c.l.bf16 %v376
        %v381 = vld [vmem:[%s1 + $0x1] sm:$0x1]
        %v382 = vlaneseq
        %v383 = vshrl.u32 %v382, 7
        %v384 = vsub.s32 0, %v383
        %v385 = vrot.slane %v381, %v384
        %v386 = vmul.f32 %v356, %v385
        %v387 = vmul.f32 %v377, %v385
        %v388 = vmul.f32 %v357, %v385
        %v389 = vmul.f32 %v378, %v385
        %v390 = vmul.f32 %v358, %v385
        %v391 = vmul.f32 %v379, %v385
        %v392 = vmul.f32 %v359, %v385
        %v393 = vmul.f32 %v380, %v385
        %vm402 = vcmask 1046528
        %v403 = vrot.slane %v386, 1
        %v404 = vrot.slane %v387, 1
        %v405 = vsel %vm402, %v403, %v404
        %v406 = vrot.slane %v388, 1
        %v407 = vrot.slane %v389, 1
        %v408 = vsel %vm402, %v406, %v407
        %v409 = vrot.slane %v390, 1
        %v410 = vrot.slane %v391, 1
        %v411 = vsel %vm402, %v409, %v410
        %v412 = vrot.slane %v392, 1
        %v413 = vrot.slane %v393, 1
        %v414 = vsel %vm402, %v412, %v413
        %v419 = vadd.f32 %v369, %v405
        %v420 = vadd.f32 %v370, %v408
        %v421 = vadd.f32 %v371, %v411
        %v422 = vadd.f32 %v372, %v414
        %v423 = vld [vmem:[%s351] sm:$0xe]
        %v424 = vld [vmem:[%s351 + $0x8] sm:$0xe]
        %v425 = vld [vmem:[%s351 + $0x10] sm:$0xe]
        %v426 = vld [vmem:[%s351 + $0x18] sm:$0xe]
        %v427 = vunpack.c.l.bf16 %v423
        %v428 = vunpack.c.l.bf16 %v424
        %v429 = vunpack.c.l.bf16 %v425
        %v430 = vunpack.c.l.bf16 %v426
        %v431 = vld [vmem:[%s1 + $0x2] sm:$0x1]
        %v432 = vlaneseq
        %v433 = vshrl.u32 %v432, 7
        %v434 = vsub.s32 0, %v433
        %v435 = vrot.slane %v431, %v434
        %v436 = vmul.f32 %v427, %v435
        %v437 = vmul.f32 %v377, %v435
        %v438 = vmul.f32 %v428, %v435
        %v439 = vmul.f32 %v378, %v435
        %v440 = vmul.f32 %v429, %v435
        %v441 = vmul.f32 %v379, %v435
        %v442 = vmul.f32 %v430, %v435
        %v443 = vmul.f32 %v380, %v435
        %vm452 = vcmask 1045504
        %v453 = vrot.slane %v436, 2
        %v454 = vrot.slane %v437, 2
        %v455 = vsel %vm452, %v453, %v454
        %v456 = vrot.slane %v438, 2
        %v457 = vrot.slane %v439, 2
        %v458 = vsel %vm452, %v456, %v457
        %v459 = vrot.slane %v440, 2
        %v460 = vrot.slane %v441, 2
        %v461 = vsel %vm452, %v459, %v460
        %v462 = vrot.slane %v442, 2
        %v463 = vrot.slane %v443, 2
        %v464 = vsel %vm452, %v462, %v463
        %v469 = vadd.f32 %v419, %v455
        %v470 = vadd.f32 %v420, %v458
        %v471 = vadd.f32 %v421, %v461
        %v472 = vadd.f32 %v422, %v464
        %s473 = sadd.s32 %s348, 1
        %s474 = smul.u32 %s473, 2
        %s475 = smul.addr %s474, 4
        %s476 = scalar_lea.vmem %s341, %s475
        %v477 = vld [vmem:[%s476] sm:$0xf]
        %v478 = vld [vmem:[%s476 + $0x8] sm:$0xf]
        %v479 = vld [vmem:[%s476 + $0x10] sm:$0xf]
        %v480 = vld [vmem:[%s476 + $0x18] sm:$0xf]
        %v481 = vunpack.c.l.bf16 %v477
        %v482 = vunpack.c.l.bf16 %v478
        %v483 = vunpack.c.l.bf16 %v479
        %v484 = vunpack.c.l.bf16 %v480
        %s485 = scalar_lea.vmem %s1, 4
        %v486 = vld [vmem:[%s485] sm:$0x1]
        %v487 = vlaneseq
        %v488 = vshrl.u32 %v487, 7
        %v489 = vsub.s32 0, %v488
        %v490 = vrot.slane %v486, %v489
        %v491 = vmul.f32 %v481, %v490
        %v492 = vmul.f32 %v482, %v490
        %v493 = vmul.f32 %v483, %v490
        %v494 = vmul.f32 %v484, %v490
        %v495 = vadd.f32 %v469, %v491
        %v496 = vadd.f32 %v470, %v492
        %v497 = vadd.f32 %v471, %v493
        %v498 = vadd.f32 %v472, %v494
        %v499 = vld [vmem:[%s476 + $0x4] sm:$0x1]
        %v500 = vld [vmem:[%s476 + $0xc] sm:$0x1]
        %v501 = vld [vmem:[%s476 + $0x14] sm:$0x1]
        %v502 = vld [vmem:[%s476 + $0x1c] sm:$0x1]
        %v503 = vunpack.c.l.bf16 %v499
        %v504 = vunpack.c.l.bf16 %v500
        %v505 = vunpack.c.l.bf16 %v501
        %v506 = vunpack.c.l.bf16 %v502
        %v507 = vld [vmem:[%s485 + $0x1] sm:$0x1]
        %v508 = vlaneseq
        %v509 = vshrl.u32 %v508, 7
        %v510 = vsub.s32 0, %v509
        %v511 = vrot.slane %v507, %v510
        %v512 = vmul.f32 %v481, %v511
        %v513 = vmul.f32 %v503, %v511
        %v514 = vmul.f32 %v482, %v511
        %v515 = vmul.f32 %v504, %v511
        %v516 = vmul.f32 %v483, %v511
        %v517 = vmul.f32 %v505, %v511
        %v518 = vmul.f32 %v484, %v511
        %v519 = vmul.f32 %v506, %v511
        %v528 = vrot.slane %v512, 1
        %v529 = vrot.slane %v513, 1
        %v530 = vsel %vm402, %v528, %v529
        %v531 = vrot.slane %v514, 1
        %v532 = vrot.slane %v515, 1
        %v533 = vsel %vm402, %v531, %v532
        %v534 = vrot.slane %v516, 1
        %v535 = vrot.slane %v517, 1
        %v536 = vsel %vm402, %v534, %v535
        %v537 = vrot.slane %v518, 1
        %v538 = vrot.slane %v519, 1
        %v539 = vsel %vm402, %v537, %v538
        %v544 = vadd.f32 %v495, %v530
        %v545 = vadd.f32 %v496, %v533
        %v546 = vadd.f32 %v497, %v536
        %v547 = vadd.f32 %v498, %v539
        %v548 = vld [vmem:[%s476] sm:$0xe]
        %v549 = vld [vmem:[%s476 + $0x8] sm:$0xe]
        %v550 = vld [vmem:[%s476 + $0x10] sm:$0xe]
        %v551 = vld [vmem:[%s476 + $0x18] sm:$0xe]
        %v552 = vunpack.c.l.bf16 %v548
        %v553 = vunpack.c.l.bf16 %v549
        %v554 = vunpack.c.l.bf16 %v550
        %v555 = vunpack.c.l.bf16 %v551
        %v556 = vld [vmem:[%s485 + $0x2] sm:$0x1]
        %v557 = vlaneseq
        %v558 = vshrl.u32 %v557, 7
        %v559 = vsub.s32 0, %v558
        %v560 = vrot.slane %v556, %v559
        %v561 = vmul.f32 %v552, %v560
        %v562 = vmul.f32 %v503, %v560
        %v563 = vmul.f32 %v553, %v560
        %v564 = vmul.f32 %v504, %v560
        %v565 = vmul.f32 %v554, %v560
        %v566 = vmul.f32 %v505, %v560
        %v567 = vmul.f32 %v555, %v560
        %v568 = vmul.f32 %v506, %v560
        %v577 = vrot.slane %v561, 2
        %v578 = vrot.slane %v562, 2
        %v579 = vsel %vm452, %v577, %v578
        %v580 = vrot.slane %v563, 2
        %v581 = vrot.slane %v564, 2
        %v582 = vsel %vm452, %v580, %v581
        %v583 = vrot.slane %v565, 2
        %v584 = vrot.slane %v566, 2
        %v585 = vsel %vm452, %v583, %v584
        %v586 = vrot.slane %v567, 2
        %v587 = vrot.slane %v568, 2
        %v588 = vsel %vm452, %v586, %v587
        %v593 = vadd.f32 %v544, %v579
        %v594 = vadd.f32 %v545, %v582
        %v595 = vadd.f32 %v546, %v585
        %v596 = vadd.f32 %v547, %v588
        %s597 = sadd.s32 %s348, 2
        %s598 = smul.u32 %s597, 2
        %s599 = smul.addr %s598, 4
        %s600 = scalar_lea.vmem %s341, %s599
        %v601 = vld [vmem:[%s600] sm:$0xf]
        %v602 = vld [vmem:[%s600 + $0x8] sm:$0xf]
        %v603 = vld [vmem:[%s600 + $0x10] sm:$0xf]
        %v604 = vld [vmem:[%s600 + $0x18] sm:$0xf]
        %v605 = vunpack.c.l.bf16 %v601
        %v606 = vunpack.c.l.bf16 %v602
        %v607 = vunpack.c.l.bf16 %v603
        %v608 = vunpack.c.l.bf16 %v604
        %s609 = scalar_lea.vmem %s1, 8
        %v610 = vld [vmem:[%s609] sm:$0x1]
        %v611 = vlaneseq
        %v612 = vshrl.u32 %v611, 7
        %v613 = vsub.s32 0, %v612
        %v614 = vrot.slane %v610, %v613
        %v615 = vmul.f32 %v605, %v614
        %v616 = vmul.f32 %v606, %v614
        %v617 = vmul.f32 %v607, %v614
        %v618 = vmul.f32 %v608, %v614
        %v619 = vadd.f32 %v593, %v615
        %v620 = vadd.f32 %v594, %v616
        %v621 = vadd.f32 %v595, %v617
        %v622 = vadd.f32 %v596, %v618
        %v623 = vld [vmem:[%s600 + $0x4] sm:$0x1]
        %v624 = vld [vmem:[%s600 + $0xc] sm:$0x1]
        %v625 = vld [vmem:[%s600 + $0x14] sm:$0x1]
        %v626 = vld [vmem:[%s600 + $0x1c] sm:$0x1]
        %v627 = vunpack.c.l.bf16 %v623
        %v628 = vunpack.c.l.bf16 %v624
        %v629 = vunpack.c.l.bf16 %v625
        %v630 = vunpack.c.l.bf16 %v626
        %v631 = vld [vmem:[%s609 + $0x1] sm:$0x1]
        %v632 = vlaneseq
        %v633 = vshrl.u32 %v632, 7
        %v634 = vsub.s32 0, %v633
        %v635 = vrot.slane %v631, %v634
        %v636 = vmul.f32 %v605, %v635
        %v637 = vmul.f32 %v627, %v635
        %v638 = vmul.f32 %v606, %v635
        %v639 = vmul.f32 %v628, %v635
        %v640 = vmul.f32 %v607, %v635
        %v641 = vmul.f32 %v629, %v635
        %v642 = vmul.f32 %v608, %v635
        %v643 = vmul.f32 %v630, %v635
        %v652 = vrot.slane %v636, 1
        %v653 = vrot.slane %v637, 1
        %v654 = vsel %vm402, %v652, %v653
        %v655 = vrot.slane %v638, 1
        %v656 = vrot.slane %v639, 1
        %v657 = vsel %vm402, %v655, %v656
        %v658 = vrot.slane %v640, 1
        %v659 = vrot.slane %v641, 1
        %v660 = vsel %vm402, %v658, %v659
        %v661 = vrot.slane %v642, 1
        %v662 = vrot.slane %v643, 1
        %v663 = vsel %vm402, %v661, %v662
        %v668 = vadd.f32 %v619, %v654
        %v669 = vadd.f32 %v620, %v657
        %v670 = vadd.f32 %v621, %v660
        %v671 = vadd.f32 %v622, %v663
        %v672 = vld [vmem:[%s600] sm:$0xe]
        %v673 = vld [vmem:[%s600 + $0x8] sm:$0xe]
        %v674 = vld [vmem:[%s600 + $0x10] sm:$0xe]
        %v675 = vld [vmem:[%s600 + $0x18] sm:$0xe]
        %v676 = vunpack.c.l.bf16 %v672
        %v677 = vunpack.c.l.bf16 %v673
        %v678 = vunpack.c.l.bf16 %v674
        %v679 = vunpack.c.l.bf16 %v675
        %v680 = vld [vmem:[%s609 + $0x2] sm:$0x1]
        %v681 = vlaneseq
        %v682 = vshrl.u32 %v681, 7
        %v683 = vsub.s32 0, %v682
        %v684 = vrot.slane %v680, %v683
        %v685 = vmul.f32 %v676, %v684
        %v686 = vmul.f32 %v627, %v684
        %v687 = vmul.f32 %v677, %v684
        %v688 = vmul.f32 %v628, %v684
        %v689 = vmul.f32 %v678, %v684
        %v690 = vmul.f32 %v629, %v684
        %v691 = vmul.f32 %v679, %v684
        %v692 = vmul.f32 %v630, %v684
        %v701 = vrot.slane %v685, 2
        %v702 = vrot.slane %v686, 2
        %v703 = vsel %vm452, %v701, %v702
        %v704 = vrot.slane %v687, 2
        %v705 = vrot.slane %v688, 2
        %v706 = vsel %vm452, %v704, %v705
        %v707 = vrot.slane %v689, 2
        %v708 = vrot.slane %v690, 2
        %v709 = vsel %vm452, %v707, %v708
        %v710 = vrot.slane %v691, 2
        %v711 = vrot.slane %v692, 2
        %v712 = vsel %vm452, %v710, %v711
        %v717 = vadd.f32 %v668, %v703
        %v718 = vadd.f32 %v669, %v706
        %v719 = vadd.f32 %v670, %v709
        %v720 = vadd.f32 %v671, %v712
        %v721 = vld [vmem:[%s2] sm:$0x1]
        %v723 = vlaneseq
        %v724 = vshrl.u32 %v723, 7
        %v725 = vsub.s32 0, %v724
        %v726 = vrot.slane %v721, %v725
        %v728 = vadd.f32 %v717, %v726
        %v729 = vadd.f32 %v718, %v726
        %v730 = vadd.f32 %v719, %v726
        %v731 = vadd.f32 %v720, %v726
        %v732 = vxor.u32 %v728, 2147483648
        %v733 = vxor.u32 %v729, 2147483648
        %v734 = vxor.u32 %v730, 2147483648
        %v735 = vxor.u32 %v731, 2147483648
        %v736 = vmul.f32 %v732, 1.442695
        %v737 = vpow.pop %v736
        %v738 = vmul.f32 %v733, 1.442695
        %v739 = vpow.pop %v738
        %v740 = vmul.f32 %v734, 1.442695
        %v741 = vpow.pop %v740
        %v742 = vmul.f32 %v735, 1.442695
        %v743 = vpow.pop %v742
        %v744 = vadd.f32 %v737, 1.0
        %v745 = vadd.f32 %v739, 1.0
        %v746 = vadd.f32 %v741, 1.0
        %v747 = vadd.f32 %v743, 1.0
        %v748 = vrcp.pop %v744
        %v749 = vmul.f32 1.0, %v748
        %v750 = vrcp.pop %v745
        %v751 = vmul.f32 1.0, %v750
        %v752 = vrcp.pop %v746
        %v753 = vmul.f32 1.0, %v752
        %v754 = vrcp.pop %v747
        %v755 = vmul.f32 1.0, %v754
        %v756 = vmul.f32 %v728, %v749
        %v757 = vmul.f32 %v729, %v751
        %v758 = vmul.f32 %v730, %v753
        %v759 = vmul.f32 %v731, %v755
        %v760 = vpack.c.bf16 %v757, %v756
        %v761 = vpack.c.bf16 %v759, %v758
        %v762 = vld [vmem:[%s3] sm:$0xf]
        %v763 = vld [vmem:[%s3 + $0x4] sm:$0xf]
        %v764 = vld [vmem:[%s3 + $0x8] sm:$0xf]
        %v765 = vld [vmem:[%s3 + $0xc] sm:$0xf]
        %v766 = vld [vmem:[%s3 + $0x10] sm:$0xf]
        %v767 = vld [vmem:[%s3 + $0x14] sm:$0xf]
        %v768 = vld [vmem:[%s3 + $0x18] sm:$0xf]
        %v769 = vld [vmem:[%s3 + $0x1c] sm:$0xf]
        %v770 = vld [vmem:[%s3 + $0x20] sm:$0xf]
        %v771 = vld [vmem:[%s3 + $0x24] sm:$0xf]
        %v772 = vld [vmem:[%s3 + $0x28] sm:$0xf]
        %v773 = vld [vmem:[%s3 + $0x2c] sm:$0xf]
        %v774 = vld [vmem:[%s3 + $0x30] sm:$0xf]
        %v775 = vld [vmem:[%s3 + $0x34] sm:$0xf]
        %v776 = vld [vmem:[%s3 + $0x38] sm:$0xf]
        %v777 = vld [vmem:[%s3 + $0x3c] sm:$0xf]
        %v778 = vld [vmem:[%s4] sm:$0x1]
        %v780 = vlaneseq
        %v781 = vshrl.u32 %v780, 7
        %v782 = vsub.s32 0, %v781
        %v783 = vrot.slane %v778, %v782
        %v801 = vunpack.c.l.b16 %v762
        %v802 = vunpack.c.l.b16 %v763
        %v803 = vunpack.c.l.b16 %v764
        %v804 = vunpack.c.l.b16 %v765
        %v805 = vunpack.c.l.b16 %v766
        %v806 = vunpack.c.l.b16 %v767
        %v807 = vunpack.c.l.b16 %v768
        %v808 = vunpack.c.l.b16 %v769
        %v809 = vunpack.c.l.b16 %v770
        %v810 = vunpack.c.l.b16 %v771
        %v811 = vunpack.c.l.b16 %v772
        %v812 = vunpack.c.l.b16 %v773
        %v813 = vunpack.c.l.b16 %v774
        %v814 = vunpack.c.l.b16 %v775
        %v815 = vunpack.c.l.b16 %v776
        %v816 = vunpack.c.l.b16 %v777
        %v817 = vpack.c.b16 %v802, %v801
        %v818 = vpack.c.b16 %v804, %v803
        %v819 = vpack.c.b16 %v806, %v805
        %v820 = vpack.c.b16 %v808, %v807
        %v821 = vpack.c.b16 %v810, %v809
        %v822 = vpack.c.b16 %v812, %v811
        %v823 = vpack.c.b16 %v814, %v813
        %v824 = vpack.c.b16 %v816, %v815
        %833 = vmatprep.subr.bf16.mxu0 0
        %834 = vmatpush1.bf16.msra.mxu0 %v817
        %835 = vmatprep.subr.bf16.mxu0 0
        %836 = vmatpush1.bf16.msra.mxu0 %v818
        %837 = vmatprep.subr.bf16.mxu0 0
        %838 = vmatpush1.bf16.msra.mxu0 %v819
        %839 = vmatprep.subr.bf16.mxu0 0
        %840 = vmatpush1.bf16.msra.mxu0 %v820
        %841 = vmatprep.subr.bf16.mxu0 0
        %842 = vmatpush1.bf16.msra.mxu0 %v821
        %843 = vmatprep.subr.bf16.mxu0 0
        %844 = vmatpush1.bf16.msra.mxu0 %v822
        %845 = vmatprep.subr.bf16.mxu0 0
        %846 = vmatpush1.bf16.msra.mxu0 %v823
        %847 = vmatprep.subr.bf16.mxu0 0
        %848 = vmatpush1.bf16.msra.mxu0 %v824
        %849 = vmatprep.subr.bf16.mxu0 0
        %850 = vmatpush1.bf16.msra.mxu0 0
        %851 = vmatprep.subr.bf16.mxu0 0
        %852 = vmatpush1.bf16.msra.mxu0 0
        %853 = vmatprep.subr.bf16.mxu0 0
        %854 = vmatpush1.bf16.msra.mxu0 0
        %855 = vmatprep.subr.bf16.mxu0 0
        %856 = vmatpush1.bf16.msra.mxu0 0
        %857 = vmatprep.subr.bf16.mxu0 0
        %858 = vmatpush1.bf16.msra.mxu0 0
        %859 = vmatprep.subr.bf16.mxu0 0
        %860 = vmatpush1.bf16.msra.mxu0 0
        %861 = vmatprep.subr.bf16.mxu0 0
        %862 = vmatpush1.bf16.msra.mxu0 0
        %863 = vmatprep.subr.bf16.mxu0 0
        %864 = vmatpush1.bf16.msra.mxu0 0
        %865 = vmatprep.mubr.bf16.mxu0 0
        %866 = vmatmul.mubr.bf16.gmra.mrb[0].mxu0 %v760
        %v867 = vpop.f32.mrb[0].mxu0
        %v868 = vadd.f32 %v783, %v867
        %v869 = vpop.f32.mrb[0].mxu0
        %v870 = vpop.f32.mrb[0].mxu0
        %v871 = vadd.f32 %v783, %v870
        %v872 = vpop.f32.mrb[0].mxu0
        %873 = vmatprep.mubr.bf16.mxu0 0
        %874 = vmatmul.mubr.bf16.gmra.mrb[0].mxu0 %v761
        %v875 = vpop.f32.mrb[0].mxu0
        %v876 = vadd.f32 %v783, %v875
        %v877 = vpop.f32.mrb[0].mxu0
        %v878 = vpop.f32.mrb[0].mxu0
        %v879 = vadd.f32 %v783, %v878
        %v880 = vpop.f32.mrb[0].mxu0
        %881 = vdwg.mxu0
        %v882 = vxor.u32 %v868, 2147483648
        %v883 = vxor.u32 %v871, 2147483648
        %v884 = vxor.u32 %v876, 2147483648
        %v885 = vxor.u32 %v879, 2147483648
        %v886 = vmul.f32 %v882, 1.442695
        %v887 = vpow.pop %v886
        %v888 = vmul.f32 %v883, 1.442695
        %v889 = vpow.pop %v888
        %v890 = vmul.f32 %v884, 1.442695
        %v891 = vpow.pop %v890
        %v892 = vmul.f32 %v885, 1.442695
        %v893 = vpow.pop %v892
        %v894 = vadd.f32 %v887, 1.0
        %v895 = vadd.f32 %v889, 1.0
        %v896 = vadd.f32 %v891, 1.0
        %v897 = vadd.f32 %v893, 1.0
        %v898 = vrcp.pop %v894
        %v899 = vmul.f32 1.0, %v898
        %v900 = vrcp.pop %v895
        %v901 = vmul.f32 1.0, %v900
        %v902 = vrcp.pop %v896
        %v903 = vmul.f32 1.0, %v902
        %v904 = vrcp.pop %v897
        %v905 = vmul.f32 1.0, %v904
        %v906 = vmul.f32 %v868, %v899
        %v907 = vmul.f32 %v871, %v901
        %v908 = vmul.f32 %v876, %v903
        %v909 = vmul.f32 %v879, %v905
        %v910 = vpack.c.bf16 %v907, %v906
        %v911 = vpack.c.bf16 %v909, %v908
        %v912 = vld [vmem:[%s5] sm:$0xf]
        %v913 = vld [vmem:[%s5 + $0x4] sm:$0xf]
        %v914 = vld [vmem:[%s5 + $0x8] sm:$0xf]
        %v915 = vld [vmem:[%s5 + $0xc] sm:$0xf]
        %v916 = vld [vmem:[%s5 + $0x10] sm:$0xf]
        %v917 = vld [vmem:[%s5 + $0x14] sm:$0xf]
        %v918 = vld [vmem:[%s5 + $0x18] sm:$0xf]
        %v919 = vld [vmem:[%s5 + $0x1c] sm:$0xf]
        %v920 = vld [vmem:[%s5 + $0x20] sm:$0xf]
        %v921 = vld [vmem:[%s5 + $0x24] sm:$0xf]
        %v922 = vld [vmem:[%s5 + $0x28] sm:$0xf]
        %v923 = vld [vmem:[%s5 + $0x2c] sm:$0xf]
        %v924 = vld [vmem:[%s5 + $0x30] sm:$0xf]
        %v925 = vld [vmem:[%s5 + $0x34] sm:$0xf]
        %v926 = vld [vmem:[%s5 + $0x38] sm:$0xf]
        %v927 = vld [vmem:[%s5 + $0x3c] sm:$0xf]
        %v928 = vld [vmem:[%s6] sm:$0x1]
        %v930 = vlaneseq
        %v931 = vshrl.u32 %v930, 7
        %v932 = vsub.s32 0, %v931
        %v933 = vrot.slane %v928, %v932
        %v951 = vunpack.c.l.b16 %v912
        %v952 = vunpack.c.l.b16 %v913
        %v953 = vunpack.c.l.b16 %v914
        %v954 = vunpack.c.l.b16 %v915
        %v955 = vunpack.c.l.b16 %v916
        %v956 = vunpack.c.l.b16 %v917
        %v957 = vunpack.c.l.b16 %v918
        %v958 = vunpack.c.l.b16 %v919
        %v959 = vunpack.c.l.b16 %v920
        %v960 = vunpack.c.l.b16 %v921
        %v961 = vunpack.c.l.b16 %v922
        %v962 = vunpack.c.l.b16 %v923
        %v963 = vunpack.c.l.b16 %v924
        %v964 = vunpack.c.l.b16 %v925
        %v965 = vunpack.c.l.b16 %v926
        %v966 = vunpack.c.l.b16 %v927
        %v967 = vpack.c.b16 %v952, %v951
        %v968 = vpack.c.b16 %v954, %v953
        %v969 = vpack.c.b16 %v956, %v955
        %v970 = vpack.c.b16 %v958, %v957
        %v971 = vpack.c.b16 %v960, %v959
        %v972 = vpack.c.b16 %v962, %v961
        %v973 = vpack.c.b16 %v964, %v963
        %v974 = vpack.c.b16 %v966, %v965
        %983 = vmatprep.subr.bf16.mxu0 0
        %984 = vmatpush1.bf16.msra.mxu0 %v967
        %985 = vmatprep.subr.bf16.mxu0 0
        %986 = vmatpush1.bf16.msra.mxu0 %v968
        %987 = vmatprep.subr.bf16.mxu0 0
        %988 = vmatpush1.bf16.msra.mxu0 %v969
        %989 = vmatprep.subr.bf16.mxu0 0
        %990 = vmatpush1.bf16.msra.mxu0 %v970
        %991 = vmatprep.subr.bf16.mxu0 0
        %992 = vmatpush1.bf16.msra.mxu0 %v971
        %993 = vmatprep.subr.bf16.mxu0 0
        %994 = vmatpush1.bf16.msra.mxu0 %v972
        %995 = vmatprep.subr.bf16.mxu0 0
        %996 = vmatpush1.bf16.msra.mxu0 %v973
        %997 = vmatprep.subr.bf16.mxu0 0
        %998 = vmatpush1.bf16.msra.mxu0 %v974
        %999 = vmatprep.subr.bf16.mxu0 0
        %1000 = vmatpush1.bf16.msra.mxu0 0
        %1001 = vmatprep.subr.bf16.mxu0 0
        %1002 = vmatpush1.bf16.msra.mxu0 0
        %1003 = vmatprep.subr.bf16.mxu0 0
        %1004 = vmatpush1.bf16.msra.mxu0 0
        %1005 = vmatprep.subr.bf16.mxu0 0
        %1006 = vmatpush1.bf16.msra.mxu0 0
        %1007 = vmatprep.subr.bf16.mxu0 0
        %1008 = vmatpush1.bf16.msra.mxu0 0
        %1009 = vmatprep.subr.bf16.mxu0 0
        %1010 = vmatpush1.bf16.msra.mxu0 0
        %1011 = vmatprep.subr.bf16.mxu0 0
        %1012 = vmatpush1.bf16.msra.mxu0 0
        %1013 = vmatprep.subr.bf16.mxu0 0
        %1014 = vmatpush1.bf16.msra.mxu0 0
        %1015 = vmatprep.mubr.bf16.mxu0 0
        %1016 = vmatmul.mubr.bf16.gmra.mrb[0].mxu0 %v910
        %v1017 = vpop.f32.mrb[0].mxu0
        %v1018 = vadd.f32 %v933, %v1017
        %v1019 = vpop.f32.mrb[0].mxu0
        %v1020 = vpop.f32.mrb[0].mxu0
        %v1021 = vadd.f32 %v933, %v1020
        %v1022 = vpop.f32.mrb[0].mxu0
        %1023 = vmatprep.mubr.bf16.mxu0 0
        %1024 = vmatmul.mubr.bf16.gmra.mrb[0].mxu0 %v911
        %v1025 = vpop.f32.mrb[0].mxu0
        %v1026 = vadd.f32 %v933, %v1025
        %v1027 = vpop.f32.mrb[0].mxu0
        %v1028 = vpop.f32.mrb[0].mxu0
        %v1029 = vadd.f32 %v933, %v1028
        %v1030 = vpop.f32.mrb[0].mxu0
        %1031 = vdwg.mxu0
        %v1032 = vxor.u32 %v1018, 2147483648
        %v1033 = vxor.u32 %v1021, 2147483648
        %v1034 = vxor.u32 %v1026, 2147483648
        %v1035 = vxor.u32 %v1029, 2147483648
        %v1036 = vmul.f32 %v1032, 1.442695
        %v1037 = vpow.pop %v1036
        %v1038 = vmul.f32 %v1033, 1.442695
        %v1039 = vpow.pop %v1038
        %v1040 = vmul.f32 %v1034, 1.442695
        %v1041 = vpow.pop %v1040
        %v1042 = vmul.f32 %v1035, 1.442695
        %v1043 = vpow.pop %v1042
        %v1044 = vadd.f32 %v1037, 1.0
        %v1045 = vadd.f32 %v1039, 1.0
        %v1046 = vadd.f32 %v1041, 1.0
        %v1047 = vadd.f32 %v1043, 1.0
        %v1048 = vrcp.pop %v1044
        %v1049 = vmul.f32 1.0, %v1048
        %v1050 = vrcp.pop %v1045
        %v1051 = vmul.f32 1.0, %v1050
        %v1052 = vrcp.pop %v1046
        %v1053 = vmul.f32 1.0, %v1052
        %v1054 = vrcp.pop %v1047
        %v1055 = vmul.f32 1.0, %v1054
        %v1056 = vmul.f32 %v1018, %v1049
        %v1057 = vmul.f32 %v1021, %v1051
        %v1058 = vmul.f32 %v1026, %v1053
        %v1059 = vmul.f32 %v1029, %v1055
        %v1060 = vld [vmem:[#allocation2] sm:$0x1]
        %v1061 = vadd.f32 %v1056, %v1057
        %v1062 = vadd.f32 %v1061, %v1058
        %v1063 = vadd.f32 %v1062, %v1059
        %v1064 = vrot.slane %v1063, 4
        %v1065 = vadd.f32 %v1063, %v1064
        %v1066 = vrot.slane %v1065, 2
        %v1067 = vadd.f32 %v1065, %v1066
        %v1068 = vrot.slane %v1067, 1
        %v1069 = vadd.f32 %v1067, %v1068
        %v1070 = vadd.f32 %v1060, %v1069
        %1071 = vst [vmem:[#allocation2] sm:$0x1] %v1070
        %p1072 = scmp.eq.s32.totalorder %s28, 1
        // Predicated region
        $region61: #{enetv2_forward.3} parent=55 // pred_check
          %p1073 = pneg %p1072
        $region62: #{enetv2_forward.3} parent=55 // pred_check_branch
          %1075 = sbr.rel (%p1073) target = $region64
        $region63: #{enetv2_forward.3} parent=55 // pred_region
          %v1076 = vld [vmem:[#allocation2] sm:$0x1]
          %v1077 = vmul.f32 %v1076, 0.015625
          %v1078 = vpack.c.bf16 %v1077, %v1077
          %v1079 = vld [vmem:[%s7] sm:$0xf]
          %v1080 = vld [vmem:[%s7 + $0x4] sm:$0xf]
          %v1081 = vld [vmem:[%s7 + $0x8] sm:$0xf]
          %v1082 = vld [vmem:[%s7 + $0xc] sm:$0xf]
          %v1083 = vld [vmem:[%s7 + $0x10] sm:$0xf]
          %v1084 = vld [vmem:[%s7 + $0x14] sm:$0xf]
          %v1085 = vld [vmem:[%s7 + $0x18] sm:$0xf]
          %v1086 = vld [vmem:[%s7 + $0x1c] sm:$0xf]
          %v1087 = vld [vmem:[%s7 + $0x20] sm:$0xf]
          %v1088 = vld [vmem:[%s7 + $0x24] sm:$0xf]
          %v1089 = vld [vmem:[%s7 + $0x28] sm:$0xf]
          %v1090 = vld [vmem:[%s7 + $0x2c] sm:$0xf]
          %v1091 = vld [vmem:[%s7 + $0x30] sm:$0xf]
          %v1092 = vld [vmem:[%s7 + $0x34] sm:$0xf]
          %v1093 = vld [vmem:[%s7 + $0x38] sm:$0xf]
          %v1094 = vld [vmem:[%s7 + $0x3c] sm:$0xf]
          %v1095 = vld [vmem:[%s8] sm:$0x1]
          %v1112 = vunpack.c.l.b16 %v1079
          %v1113 = vunpack.c.l.b16 %v1080
          %v1114 = vunpack.c.l.b16 %v1081
          %v1115 = vunpack.c.l.b16 %v1082
          %v1116 = vunpack.c.l.b16 %v1083
          %v1117 = vunpack.c.l.b16 %v1084
          %v1118 = vunpack.c.l.b16 %v1085
          %v1119 = vunpack.c.l.b16 %v1086
          %v1120 = vunpack.c.l.b16 %v1087
          %v1121 = vunpack.c.l.b16 %v1088
          %v1122 = vunpack.c.l.b16 %v1089
          %v1123 = vunpack.c.l.b16 %v1090
          %v1124 = vunpack.c.l.b16 %v1091
          %v1125 = vunpack.c.l.b16 %v1092
          %v1126 = vunpack.c.l.b16 %v1093
          %v1127 = vunpack.c.l.b16 %v1094
          %v1128 = vpack.c.b16 %v1113, %v1112
          %v1129 = vpack.c.b16 %v1115, %v1114
          %v1130 = vpack.c.b16 %v1117, %v1116
          %v1131 = vpack.c.b16 %v1119, %v1118
          %v1132 = vpack.c.b16 %v1121, %v1120
          %v1133 = vpack.c.b16 %v1123, %v1122
          %v1134 = vpack.c.b16 %v1125, %v1124
          %v1135 = vpack.c.b16 %v1127, %v1126
          %1144 = vmatprep.subr.bf16.mxu0 0
          %1145 = vmatpush1.bf16.msra.mxu0 %v1128
          %1146 = vmatprep.subr.bf16.mxu0 0
          %1147 = vmatpush1.bf16.msra.mxu0 %v1129
          %1148 = vmatprep.subr.bf16.mxu0 0
          %1149 = vmatpush1.bf16.msra.mxu0 %v1130
          %1150 = vmatprep.subr.bf16.mxu0 0
          %1151 = vmatpush1.bf16.msra.mxu0 %v1131
          %1152 = vmatprep.subr.bf16.mxu0 0
          %1153 = vmatpush1.bf16.msra.mxu0 %v1132
          %1154 = vmatprep.subr.bf16.mxu0 0
          %1155 = vmatpush1.bf16.msra.mxu0 %v1133
          %1156 = vmatprep.subr.bf16.mxu0 0
          %1157 = vmatpush1.bf16.msra.mxu0 %v1134
          %1158 = vmatprep.subr.bf16.mxu0 0
          %1159 = vmatpush1.bf16.msra.mxu0 %v1135
          %1160 = vmatprep.subr.bf16.mxu0 0
          %1161 = vmatpush1.bf16.msra.mxu0 0
          %1162 = vmatprep.subr.bf16.mxu0 0
          %1163 = vmatpush1.bf16.msra.mxu0 0
          %1164 = vmatprep.subr.bf16.mxu0 0
          %1165 = vmatpush1.bf16.msra.mxu0 0
          %1166 = vmatprep.subr.bf16.mxu0 0
          %1167 = vmatpush1.bf16.msra.mxu0 0
          %1168 = vmatprep.subr.bf16.mxu0 0
          %1169 = vmatpush1.bf16.msra.mxu0 0
          %1170 = vmatprep.subr.bf16.mxu0 0
          %1171 = vmatpush1.bf16.msra.mxu0 0
          %1172 = vmatprep.subr.bf16.mxu0 0
          %1173 = vmatpush1.bf16.msra.mxu0 0
          %1174 = vmatprep.subr.bf16.mxu0 0
          %1175 = vmatpush1.bf16.msra.mxu0 0
          %1176 = vmatprep.mubr.bf16.mxu0 0
          %1177 = vmatmul.mubr.bf16.gmra.mrb[0].mxu0 %v1078
          %v1178 = vpop.f32.mrb[0].mxu0
          %v1179 = vadd.f32 %v1095, %v1178
          %v1180 = vpop.f32.mrb[0].mxu0
          %v1181 = vpop.f32.mrb[0].mxu0
          %v1182 = vpop.f32.mrb[0].mxu0
          %1183 = vdwg.mxu0
          %1184 = vst [vmem:[%s336] sm:$0x1] %v1179
        $region64: #{enetv2_forward.3} parent=55 // pred_fallthru
          _
        %s1185 = sand.u32 %s237, 1
        %s1186 = scalar_lea.sflag [#allocation4], %s1185
        %s1187 = sand.u32 %s237, 1
        %s1188 = scalar_lea.vmem [#allocation3], %s1187
        // Predicated region
        $region65: #{enetv2_forward.3} parent=55 // pred_check
          %p1189 = pneg %p247
        $region66: #{enetv2_forward.3} parent=55 // pred_check_branch
          %1191 = sbr.rel (%p1189) target = $region68
        $region67: #{enetv2_forward.3} parent=55 // pred_region
          %s1193 = ssub.s32 16, 16
          %1194 = vsyncadd %s1186, %s1193
          %s1195 = smul.addr %s27, 16
          %s1196 = scalar_lea.hbm %s9, %s1195
          %s1198 = sshll.u32 %s1188, 4
          %s1199 = int_to_ptr.vmem [resolvable:$true] %s1198
          %1201 = dma.vmem_to_hbm [thread:$0]  %s1199, 16, %s1196, %s1186
        $region68: #{enetv2_forward.3} parent=55 // pred_fallthru
          _
      $region56: #{enetv2_forward.3} parent=5 // pred_fallthru
        _
      %p1202 = scmp.le.s32.totalorder 2, %s18
      // Predicated region
      $region69: #{enetv2_forward.3} parent=5 // pred_check
        %p1203 = pneg %p1202
      $region70: #{enetv2_forward.3} parent=5 // pred_check_branch
        %1205 = sbr.rel (%p1203) target = $region72
      $region71: #{enetv2_forward.3} parent=5 // pred_region
        %s1206 = ssub.s32 %s18, 2
        // Predicated region
        $region73: #{enetv2_forward.3} parent=71 // pred_check
          %p1207 = pneg %p253
        $region74: #{enetv2_forward.3} parent=71 // pred_check_branch
          %1209 = sbr.rel (%p1207) target = $region76
        $region75: #{enetv2_forward.3} parent=71 // pred_region
          %s1210 = sand.u32 %s238, 1
          %s1211 = scalar_lea.sflag [#allocation4], %s1210
          %s1212 = sand.u32 %s238, 1
          %s1213 = scalar_lea.vmem [#allocation3], %s1212
          %1214 = dma.done %s1211, 16
        $region76: #{enetv2_forward.3} parent=71 // pred_fallthru
          _
      $region72: #{enetv2_forward.3} parent=5 // pred_fallthru
        _
    $region6: #{enetv2_forward.3} parent=1 // loop_footer
      %s22 = sadd.s32 1, %s18
    $region7: #{enetv2_forward.3} parent=1 // loop_footer_branch
      %17 = sbr.rel target = $region3
    $region8: #{enetv2_forward.3} parent=1 // loop_exit
      _
    %1215 = vsyncpa [#allocation4], 1
    %s1216 = scalar_lea.sflag [#allocation4], 1
    %1217 = vsyncpa %s1216, 1

</llo_original>
